<compile_context>
chip_gen: v7x
topology: tpu7x:2x2x1
jax: 0.10.0
libtpu: 0.0.40
codegen_flags: <defaults>
</compile_context>

<pallas_src>
import functools

import jax
import jax.numpy as jnp
from jax import lax
from jax.experimental import pallas as pl
from jax.experimental.pallas import tpu as pltpu


def _round_up(v, m):
    return ((v + m - 1) // m) * m


def _tpu_caps():
    """Best-effort (vmem_capacity_bytes, num_tensorcores) for the local chip."""
    vmem_cap = 64 << 20           # conservative default = v7x per-TensorCore VMEM
    num_tc = 1
    try:
        info = pltpu.get_tpu_info()
        cap = getattr(info, "vmem_capacity_bytes", None)
        if cap:
            vmem_cap = int(cap)
        cores = getattr(info, "num_cores", None) or getattr(info, "tensorcore_count", None)
        if cores:
            num_tc = max(1, int(cores))
    except Exception:
        pass
    try:
        kind = jax.local_devices()[0].device_kind.lower()
        if "v7" in kind:
            num_tc = max(num_tc, 2)
            vmem_cap = min(vmem_cap, 64 << 20)   # 64 MiB per TC on v7x
    except Exception:
        pass
    return vmem_cap, num_tc


# ------------------------------------------------------------------------------------
# Weight preparation (hoisted out of the per-call hot path)
# ------------------------------------------------------------------------------------
def prepare_euler_aut2_params(w0, b0, w1, b1, wo, alpha=0.5, *, weight_dtype=jnp.bfloat16):
    """Fuse, transpose, pad and (optionally) down-cast the per-block weights once.

    torch.nn.Linear semantics: out = x @ W.T + b.  The two inner Linears are fused:
        Wc[i] rows [0:D)      = alpha       * W1[i]^T
        Wc[i] rows [Hp:Hp+D)  = (1 - alpha) * W0[i]^T
        bc[i]                 = alpha*b1[i] + (1-alpha)*b0[i]
    so each block needs one (tm, 2*Hp) x (2*Hp, Drp) MXU matmul.  For D <= 64 the y/z
    carry is packed into a single 128-lane tile (Hp = 64), halving K and wc residency.
    """
    B, D_r, D = w0.shape
    f32 = jnp.float32

    w1t = alpha * jnp.swapaxes(w1.astype(f32), 1, 2)            # (B, D, D_r)
    w0t = (1.0 - alpha) * jnp.swapaxes(w0.astype(f32), 1, 2)    # (B, D, D_r)
    bc = alpha * b1.astype(f32) + (1.0 - alpha) * b0.astype(f32)
    wot = jnp.swapaxes(wo.astype(f32), 1, 2)                    # (B, D_r, D)

    packed = D <= 64
    Hp = 64 if packed else _round_up(D, 128)     # per-state lane width
    Drp = _round_up(D_r, 128)
    Cw = 2 * Hp                                  # fused K / carry width
    Wout = Cw if packed else Hp                  # outer-matmul / output lane width

    wc = jnp.zeros((B, Cw, Drp), f32)
    wc = wc.at[:, :D, :D_r].set(w1t)
    wc = wc.at[:, Hp:Hp + D, :D_r].set(w0t)
    bcp = jnp.zeros((B, 1, Drp), f32).at[:, 0, :D_r].set(bc)
    wop = jnp.zeros((B, Drp, Wout), f32).at[:, :D_r, :D].set(wot)

    return dict(
        wc=wc.astype(weight_dtype),
        bc=bcp,                                  # bias stays f32 (added to f32 acc)
        wot=wop.astype(weight_dtype),
        D=D, D_r=D_r, B=B, Hp=Hp, Drp=Drp, packed=packed, Wout=Wout)


# ------------------------------------------------------------------------------------
# Kernels
# ------------------------------------------------------------------------------------
def _euler_kernel_resident(x_ref, wc_ref, bc_ref, wot_ref, o_ref, yz_sc, *,
                           B, Hp, packed, carry_in_regs, unroll):
    """Whole B-block recurrence for one batch tile; the weight stack is VMEM-resident.

    x_ref   : (tm, Xp)         lane-padded input tile (Xp = 2*Hp if packed else Hp)
    wc_ref  : (B, 2*Hp, Drp)   fused inner weights
    bc_ref  : (B, 1, Drp) f32  fused inner bias
    wot_ref : (B, Drp, Wout)   outer weights (pre-transposed), columns [0:D) live
    o_ref   : (tm, Wout)       output tile (y in lanes [0:D))
    yz_sc   : (tm, 2*Hp) f32   carry scratch (unused when the carry lives in vregs)
    """
    tm = x_ref.shape[0]
    Cw = 2 * Hp
    wdt = wc_ref.dtype                      # bf16 (or f32) matmul operand dtype
    xf = x_ref[...].astype(jnp.float32)

    def inner(c, i):
        # Fused inner stage: alpha*inner_1(y) + (1-alpha)*inner_0(z) as ONE matmul.
        pre = jnp.dot(c.astype(wdt), wc_ref[i], preferred_element_type=jnp.float32)
        t = jnp.tanh(pre + bc_ref[i])       # f32 tanh on the EUP
        return jnp.dot(t.astype(wdt), wot_ref[i], preferred_element_type=jnp.float32)

    if packed:
        # y and z share one 128-lane tile: y -> lanes [0:Hp), z -> lanes [Hp:2*Hp).
        y_mask = lax.broadcasted_iota(jnp.int32, (tm, Cw), 1) < Hp   # hoisted
        c0 = xf + pltpu.roll(xf, Hp, axis=1)                         # [x | x]

        def step(i, c):
            # c = [y | z] -> [y + delta | y]; delta is zero in the z half.
            return jnp.where(y_mask, c, pltpu.roll(c, Hp, axis=1)) + inner(c, i)

        if carry_in_regs:
            c = lax.fori_loop(0, B, step, c0, unroll=unroll)
        else:
            yz_sc[...] = c0

            def step_mem(i, carry):
                yz_sc[...] = step(i, yz_sc[...])
                return carry

            lax.fori_loop(0, B, step_mem, 0, unroll=unroll)
            c = yz_sc[...]
        o_ref[...] = c[:, :o_ref.shape[1]].astype(o_ref.dtype)
    else:
        # D > 64: y / z each occupy a lane-tile-aligned half of the scratch carry.
        yz_sc[:, :Hp] = xf
        yz_sc[:, Hp:] = xf

        def step_mem(i, carry):
            c = yz_sc[...]
            delta = inner(c, i)             # (tm, Hp)
            y = c[:, :Hp]
            yz_sc[:, Hp:] = y               # z <- previous y
            yz_sc[:, :Hp] = y + delta       # y <- y + outer(tanh(...))
            return carry

        lax.fori_loop(0, B, step_mem, 0, unroll=unroll)
        o_ref[...] = yz_sc[:, :Hp].astype(o_ref.dtype)


def _euler_kernel_stream(x_ref, wc_ref, bc_ref, wot_ref, o_ref, yz_sc, *, Hp, packed):
    """One (batch-tile, block) grid step; weights are streamed per block (double
    buffered by the pipeline) and the y/z carry lives in VMEM scratch across blocks."""
    b = pl.program_id(1)
    tm = x_ref.shape[0]
    Cw = 2 * Hp
    wdt = wc_ref.dtype

    @pl.when(b == 0)
    def _init():
        xf = x_ref[...].astype(jnp.float32)
        if packed:
            yz_sc[...] = xf + pltpu.roll(xf, Hp, axis=1)
        else:
            yz_sc[:, :Hp] = xf
            yz_sc[:, Hp:] = xf

    c = yz_sc[...]
    pre = jnp.dot(c.astype(wdt), wc_ref[0], preferred_element_type=jnp.float32)
    t = jnp.tanh(pre + bc_ref[0])
    delta = jnp.dot(t.astype(wdt), wot_ref[0], preferred_element_type=jnp.float32)
    if packed:
        y_mask = lax.broadcasted_iota(jnp.int32, (tm, Cw), 1) < Hp
        yz_sc[...] = jnp.where(y_mask, c, pltpu.roll(c, Hp, axis=1)) + delta
    else:
        y = c[:, :Hp]
        yz_sc[:, Hp:] = y
        yz_sc[:, :Hp] = y + delta

    @pl.when(b == pl.num_programs(1) - 1)
    def _finalize():
        o_ref[...] = yz_sc[:, :o_ref.shape[1]].astype(o_ref.dtype)


# ------------------------------------------------------------------------------------
# Wrappers
# ------------------------------------------------------------------------------------
def _euler_aut2_call(x, params, *, tm, force_stream, weight_buffers):
    N, D = x.shape
    assert D == params["D"], (D, params["D"])
    B, Hp, Drp = params["B"], params["Hp"], params["Drp"]
    packed, Wout = params["packed"], params["Wout"]
    wc, bc, wot = params["wc"], params["bc"], params["wot"]
    Cw = 2 * Hp
    Xp = Cw if packed else Hp                      # lane-padded input width

    vmem_cap, num_tc = _tpu_caps()
    n_wbuf = weight_buffers if weight_buffers is not None else 2
    w_bytes = (wc.size * wc.dtype.itemsize + bc.size * bc.dtype.itemsize
               + wot.size * wot.dtype.itemsize)

    # resident weights vs. per-block streaming (v7x: keep residency <= ~45% of VMEM)
    use_stream = force_stream or (n_wbuf * w_bytes > int(0.45 * vmem_cap))
    per_block_w = (wc.dtype.itemsize * Cw * Drp + bc.dtype.itemsize * Drp
                   + wot.dtype.itemsize * Drp * Wout)
    live_w = 2 * per_block_w if use_stream else n_wbuf * w_bytes

    # ---- batch tiling -----------------------------------------------------------------
    xb = x.dtype.itemsize
    N8 = _round_up(max(N, 1), 8)
    per_row = 2 * Xp * xb + 2 * Wout * xb + Cw * 4   # dbl-buffered x/out tiles + carry
    budget = int(0.6 * vmem_cap) - live_w
    max_rows = min(1024, max(8, (budget // max(per_row, 1)) // 8 * 8))
    if tm is None:
        if num_tc > 1 and N8 > 8:
            tm = _round_up(pl.cdiv(N8, num_tc), 8)   # keep every TensorCore busy
        else:
            tm = N8                                  # single TC: one big tile
    tm = max(8, min(_round_up(tm, 8), max_rows))
    grid_m = pl.cdiv(N8, tm)
    if num_tc > 1 and grid_m > 1:
        grid_m = _round_up(grid_m, num_tc)           # even split across TensorCores
    N_full = grid_m * tm
    xp = jnp.pad(x, ((0, N_full - N), (0, Xp - D)))

    est = live_w + per_row * tm + (2 << 20)
    vmem_limit = int(min(max(int(1.4 * est), 16 << 20), int(0.9 * vmem_cap)))

    out_shape = jax.ShapeDtypeStruct((N_full, Wout), x.dtype)

    if use_stream:
        kernel = functools.partial(_euler_kernel_stream, Hp=Hp, packed=packed)
        grid_spec = pltpu.PrefetchScalarGridSpec(
            num_scalar_prefetch=0,
            grid=(grid_m, B),
            in_specs=[
                pl.BlockSpec((tm, Xp), lambda m, b: (m, 0)),
                pl.BlockSpec((1, Cw, Drp), lambda m, b: (b, 0, 0)),
                pl.BlockSpec((1, 1, Drp), lambda m, b: (b, 0, 0)),
                pl.BlockSpec((1, Drp, Wout), lambda m, b: (b, 0, 0)),
            ],
            out_specs=pl.BlockSpec((tm, Wout), lambda m, b: (m, 0)),
            scratch_shapes=[pltpu.VMEM((tm, Cw), jnp.float32)],
        )
        dims = ("parallel", "arbitrary")
    else:
        carry_in_regs = packed and (tm * Cw * 4 <= 32 * 1024)
        unroll = True if B <= 8 else 4               # avoid code blowup for large B
        kernel = functools.partial(_euler_kernel_resident, B=B, Hp=Hp, packed=packed,
                                   carry_in_regs=carry_in_regs, unroll=unroll)

        def _wspec(shape):
            imap = lambda m, _n=len(shape): (0,) * _n
            if weight_buffers is None:
                return pl.BlockSpec(shape, imap)
            return pl.BlockSpec(shape, imap, pipeline_mode=pl.Buffered(weight_buffers))

        grid_spec = pltpu.PrefetchScalarGridSpec(
            num_scalar_prefetch=0,
            grid=(grid_m,),
            in_specs=[
                pl.BlockSpec((tm, Xp), lambda m: (m, 0)),
                _wspec((B, Cw, Drp)),     # fused inner weights (resident)
                _wspec((B, 1, Drp)),      # fused inner bias
                _wspec((B, Drp, Wout)),   # outer weights (resident)
            ],
            out_specs=pl.BlockSpec((tm, Wout), lambda m: (m, 0)),
            scratch_shapes=[pltpu.VMEM((tm, Cw), jnp.float32)],
        )
        dims = ("parallel",)

    out = pl.pallas_call(
        kernel,
        out_shape=out_shape,
        grid_spec=grid_spec,
        compiler_params=pltpu.CompilerParams(
            dimension_semantics=dims, vmem_limit_bytes=vmem_limit),
    )(xp, wc, bc, wot)
    return out[:N, :D]


def euler_aut2_apply(x, params, *, tm=None, force_stream=False):
    """Forward pass with pre-prepared params (see prepare_euler_aut2_params)."""
    try:
        return _euler_aut2_call(x, params, tm=tm, force_stream=force_stream,
                                weight_buffers=1)
    except Exception:
        # Fallback for environments where pl.Buffered(1) on resident weight specs is
        # rejected: retry with the pipeline's default (double) buffering.
        return _euler_aut2_call(x, params, tm=tm, force_stream=force_stream,
                                weight_buffers=None)


def euler_aut2_pallas(x, w0, b0, w1, b1, wo, alpha=0.5, *,
                      weight_dtype=jnp.bfloat16, tm=None, force_stream=False):
    """One-shot convenience wrapper.  For repeated calls with the same weights, call
    prepare_euler_aut2_params once and reuse the result with euler_aut2_apply."""
    params = prepare_euler_aut2_params(w0, b0, w1, b1, wo, alpha, weight_dtype=weight_dtype)
    return euler_aut2_apply(x, params, tm=tm, force_stream=force_stream)


def euler_aut2_ref(x, w0, b0, w1, b1, wo, alpha=0.5):
    """Pure-JAX reference mirroring the PyTorch forward (f32 math)."""
    y = x.astype(jnp.float32)
    z = x.astype(jnp.float32)
    for i in range(w0.shape[0]):
        w_prev = y
        h = jnp.tanh(alpha * (y @ w1[i].T + b1[i]) + (1.0 - alpha) * (z @ w0[i].T + b0[i]))
        y = y + h @ wo[i].T
        z = w_prev
    return y.astype(x.dtype)


if __name__ == "__main__":
    # Small shapes consistent with the module: batch N, feature D, reservoir D_r, B blocks.
    N, D, D_r, B = 8, 32, 64, 3
    alpha = 0.5

    key = jax.random.PRNGKey(0)
    kx, k0, kb0, k1, kb1, ko = jax.random.split(key, 6)

    x = jax.random.normal(kx, (N, D), dtype=jnp.float32)
    w0 = jax.random.normal(k0, (B, D_r, D), dtype=jnp.float32) * 0.1
    b0 = jax.random.normal(kb0, (B, D_r), dtype=jnp.float32) * 0.1
    w1 = jax.random.normal(k1, (B, D_r, D), dtype=jnp.float32) * 0.1
    b1 = jax.random.normal(kb1, (B, D_r), dtype=jnp.float32) * 0.1
    wo = jax.random.normal(ko, (B, D, D_r), dtype=jnp.float32) * 0.1

    ref = euler_aut2_ref(x, w0, b0, w1, b1, wo, alpha)

    # Default fast path: bf16 weights / matmul operands, f32 accumulation, resident weights.
    params_bf16 = prepare_euler_aut2_params(w0, b0, w1, b1, wo, alpha)
    out_bf16 = jax.block_until_ready(euler_aut2_apply(x, params_bf16))
    assert out_bf16.shape == (N, D)
    assert jnp.allclose(out_bf16, ref, atol=3e-2, rtol=3e-2), "bf16 path mismatch vs reference"

    # f32-weight path: tight numerical check of the fused-kernel math.
    params_f32 = prepare_euler_aut2_params(w0, b0, w1, b1, wo, alpha,
                                           weight_dtype=jnp.float32)
    out_f32 = jax.block_until_ready(euler_aut2_apply(x, params_f32))
    assert jnp.allclose(out_f32, ref, atol=1e-4, rtol=1e-4), "f32 path mismatch vs reference"

    # Streaming-weights fallback (selected automatically when the stack exceeds the
    # per-generation VMEM residency budget); exercised explicitly here.
    out_stream = jax.block_until_ready(euler_aut2_apply(x, params_f32, force_stream=True))
    assert jnp.allclose(out_stream, ref, atol=1e-4, rtol=1e-4), "streaming path mismatch"

    print("KERNEL_OK")
</pallas_src>

<mosaic_0001>
module attributes {stable_mosaic.version = 11 : i64} {
  func.func @_euler_kernel_resident(%arg0: i32, %arg1: memref<8x128xf32, #tpu.memory_space<vmem>>, %arg2: memref<3x128x128xbf16, #tpu.memory_space<vmem>>, %arg3: memref<3x1x128xf32, #tpu.memory_space<vmem>>, %arg4: memref<3x128x128xbf16, #tpu.memory_space<vmem>>, %arg5: memref<8x128xf32, #tpu.memory_space<vmem>>, %arg6: memref<8x128xf32, #tpu.memory_space<vmem>>) attributes {dimension_semantics = [#tpu.dimension_semantics<parallel>], iteration_bounds = array<i64: 1>, scalar_prefetch = 0 : i64, scratch_operands = 1 : i64, tpu.core_type = #tpu.core_type<tc>, window_params = [{transform_indices = @transform_0, window_bounds = array<i64: 8, 128>}, {pipeline_mode = #tpu.pipeline_mode<synchronous>, transform_indices = @transform_1, window_bounds = array<i64: 3, 128, 128>}, {pipeline_mode = #tpu.pipeline_mode<synchronous>, transform_indices = @transform_2, window_bounds = array<i64: 3, 1, 128>}, {pipeline_mode = #tpu.pipeline_mode<synchronous>, transform_indices = @transform_3, window_bounds = array<i64: 3, 128, 128>}, {transform_indices = @transform_4, window_bounds = array<i64: 8, 128>}]} {
    %c0 = arith.constant 0 : index
    %c0_0 = arith.constant 0 : index
    %0 = vector.load %arg1[%c0, %c0_0] : memref<8x128xf32, #tpu.memory_space<vmem>>, vector<8x128xf32>
    %1 = tpu.iota {dimensions = array<i32: 1>} : vector<8x128xi32>
    %c64_i32 = arith.constant 64 : i32
    %2 = vector.broadcast %c64_i32 : i32 to vector<8x128xi32>
    %3 = arith.cmpi slt, %1, %2 : vector<8x128xi32>
    %c64_i32_1 = arith.constant 64 : i32
    %4 = tpu.dynamic_rotate %0 by %c64_i32_1 dim 1 : vector<8x128xf32>, i32 -> vector<8x128xf32>
    %5 = arith.addf %0, %4 : vector<8x128xf32>
    %c0_i32 = arith.constant 0 : i32
    %c64_i32_2 = arith.constant 64 : i32
    %6 = tpu.dynamic_rotate %5 by %c64_i32_2 dim 1 : vector<8x128xf32>, i32 -> vector<8x128xf32>
    %7 = arith.select %3, %5, %6 : vector<8x128xi1>, vector<8x128xf32>
    %8 = arith.truncf %5 : vector<8x128xf32> to vector<8x128xbf16>
    %9 = arith.index_cast %c0_i32 : i32 to index
    %c0_3 = arith.constant 0 : index
    %c0_4 = arith.constant 0 : index
    %10 = vector.load %arg2[%9, %c0_3, %c0_4] : memref<3x128x128xbf16, #tpu.memory_space<vmem>>, vector<1x128x128xbf16>
    %11 = vector.shape_cast %10 : vector<1x128x128xbf16> to vector<128x128xbf16>
    %cst = arith.constant dense<0.000000e+00> : vector<8x128xf32>
    %12 = tpu.matmul %8, %11, %cst {dimension_numbers = #tpu.dot_dimension_numbers<[1], [0], [0], [1], [0, 0, 1, 1], [], []>} : vector<8x128xbf16>, vector<128x128xbf16>, vector<8x128xf32> -> vector<8x128xf32>
    %13 = arith.index_cast %c0_i32 : i32 to index
    %c0_5 = arith.constant 0 : index
    %c0_6 = arith.constant 0 : index
    %14 = vector.load %arg3[%13, %c0_5, %c0_6] : memref<3x1x128xf32, #tpu.memory_space<vmem>>, vector<1x1x128xf32>
    %15 = vector.shape_cast %14 : vector<1x1x128xf32> to vector<1x128xf32>
    %16 = vector.broadcast %15 : vector<1x128xf32> to vector<8x128xf32>
    %17 = arith.addf %12, %16 : vector<8x128xf32>
    %18 = math.tanh %17 : vector<8x128xf32>
    %19 = arith.truncf %18 : vector<8x128xf32> to vector<8x128xbf16>
    %20 = arith.index_cast %c0_i32 : i32 to index
    %c0_7 = arith.constant 0 : index
    %c0_8 = arith.constant 0 : index
    %21 = vector.load %arg4[%20, %c0_7, %c0_8] : memref<3x128x128xbf16, #tpu.memory_space<vmem>>, vector<1x128x128xbf16>
    %22 = vector.shape_cast %21 : vector<1x128x128xbf16> to vector<128x128xbf16>
    %cst_9 = arith.constant dense<0.000000e+00> : vector<8x128xf32>
    %23 = tpu.matmul %19, %22, %cst_9 {dimension_numbers = #tpu.dot_dimension_numbers<[1], [0], [0], [1], [0, 0, 1, 1], [], []>} : vector<8x128xbf16>, vector<128x128xbf16>, vector<8x128xf32> -> vector<8x128xf32>
    %24 = arith.addf %7, %23 : vector<8x128xf32>
    %c1_i32 = arith.constant 1 : i32
    %c64_i32_10 = arith.constant 64 : i32
    %25 = tpu.dynamic_rotate %24 by %c64_i32_10 dim 1 : vector<8x128xf32>, i32 -> vector<8x128xf32>
    %26 = arith.select %3, %24, %25 : vector<8x128xi1>, vector<8x128xf32>
    %27 = arith.truncf %24 : vector<8x128xf32> to vector<8x128xbf16>
    %28 = arith.index_cast %c1_i32 : i32 to index
    %c0_11 = arith.constant 0 : index
    %c0_12 = arith.constant 0 : index
    %29 = vector.load %arg2[%28, %c0_11, %c0_12] : memref<3x128x128xbf16, #tpu.memory_space<vmem>>, vector<1x128x128xbf16>
    %30 = vector.shape_cast %29 : vector<1x128x128xbf16> to vector<128x128xbf16>
    %cst_13 = arith.constant dense<0.000000e+00> : vector<8x128xf32>
    %31 = tpu.matmul %27, %30, %cst_13 {dimension_numbers = #tpu.dot_dimension_numbers<[1], [0], [0], [1], [0, 0, 1, 1], [], []>} : vector<8x128xbf16>, vector<128x128xbf16>, vector<8x128xf32> -> vector<8x128xf32>
    %32 = arith.index_cast %c1_i32 : i32 to index
    %c0_14 = arith.constant 0 : index
    %c0_15 = arith.constant 0 : index
    %33 = vector.load %arg3[%32, %c0_14, %c0_15] : memref<3x1x128xf32, #tpu.memory_space<vmem>>, vector<1x1x128xf32>
    %34 = vector.shape_cast %33 : vector<1x1x128xf32> to vector<1x128xf32>
    %35 = vector.broadcast %34 : vector<1x128xf32> to vector<8x128xf32>
    %36 = arith.addf %31, %35 : vector<8x128xf32>
    %37 = math.tanh %36 : vector<8x128xf32>
    %38 = arith.truncf %37 : vector<8x128xf32> to vector<8x128xbf16>
    %39 = arith.index_cast %c1_i32 : i32 to index
    %c0_16 = arith.constant 0 : index
    %c0_17 = arith.constant 0 : index
    %40 = vector.load %arg4[%39, %c0_16, %c0_17] : memref<3x128x128xbf16, #tpu.memory_space<vmem>>, vector<1x128x128xbf16>
    %41 = vector.shape_cast %40 : vector<1x128x128xbf16> to vector<128x128xbf16>
    %cst_18 = arith.constant dense<0.000000e+00> : vector<8x128xf32>
    %42 = tpu.matmul %38, %41, %cst_18 {dimension_numbers = #tpu.dot_dimension_numbers<[1], [0], [0], [1], [0, 0, 1, 1], [], []>} : vector<8x128xbf16>, vector<128x128xbf16>, vector<8x128xf32> -> vector<8x128xf32>
    %43 = arith.addf %26, %42 : vector<8x128xf32>
    %c2_i32 = arith.constant 2 : i32
    %c64_i32_19 = arith.constant 64 : i32
    %44 = tpu.dynamic_rotate %43 by %c64_i32_19 dim 1 : vector<8x128xf32>, i32 -> vector<8x128xf32>
    %45 = arith.select %3, %43, %44 : vector<8x128xi1>, vector<8x128xf32>
    %46 = arith.truncf %43 : vector<8x128xf32> to vector<8x128xbf16>
    %47 = arith.index_cast %c2_i32 : i32 to index
    %c0_20 = arith.constant 0 : index
    %c0_21 = arith.constant 0 : index
    %48 = vector.load %arg2[%47, %c0_20, %c0_21] : memref<3x128x128xbf16, #tpu.memory_space<vmem>>, vector<1x128x128xbf16>
    %49 = vector.shape_cast %48 : vector<1x128x128xbf16> to vector<128x128xbf16>
    %cst_22 = arith.constant dense<0.000000e+00> : vector<8x128xf32>
    %50 = tpu.matmul %46, %49, %cst_22 {dimension_numbers = #tpu.dot_dimension_numbers<[1], [0], [0], [1], [0, 0, 1, 1], [], []>} : vector<8x128xbf16>, vector<128x128xbf16>, vector<8x128xf32> -> vector<8x128xf32>
    %51 = arith.index_cast %c2_i32 : i32 to index
    %c0_23 = arith.constant 0 : index
    %c0_24 = arith.constant 0 : index
    %52 = vector.load %arg3[%51, %c0_23, %c0_24] : memref<3x1x128xf32, #tpu.memory_space<vmem>>, vector<1x1x128xf32>
    %53 = vector.shape_cast %52 : vector<1x1x128xf32> to vector<1x128xf32>
    %54 = vector.broadcast %53 : vector<1x128xf32> to vector<8x128xf32>
    %55 = arith.addf %50, %54 : vector<8x128xf32>
    %56 = math.tanh %55 : vector<8x128xf32>
    %57 = arith.truncf %56 : vector<8x128xf32> to vector<8x128xbf16>
    %58 = arith.index_cast %c2_i32 : i32 to index
    %c0_25 = arith.constant 0 : index
    %c0_26 = arith.constant 0 : index
    %59 = vector.load %arg4[%58, %c0_25, %c0_26] : memref<3x128x128xbf16, #tpu.memory_space<vmem>>, vector<1x128x128xbf16>
    %60 = vector.shape_cast %59 : vector<1x128x128xbf16> to vector<128x128xbf16>
    %cst_27 = arith.constant dense<0.000000e+00> : vector<8x128xf32>
    %61 = tpu.matmul %57, %60, %cst_27 {dimension_numbers = #tpu.dot_dimension_numbers<[1], [0], [0], [1], [0, 0, 1, 1], [], []>} : vector<8x128xbf16>, vector<128x128xbf16>, vector<8x128xf32> -> vector<8x128xf32>
    %62 = arith.addf %45, %61 : vector<8x128xf32>
    %c3_i32 = arith.constant 3 : i32
    %c0_28 = arith.constant 0 : index
    %c0_29 = arith.constant 0 : index
    %63 = vector.load %arg5[%c0_28, %c0_29] : memref<8x128xf32, #tpu.memory_space<vmem>>, vector<8x128xf32>
    tpu.vector_store %arg5[%c0_28, %c0_29], %62 {strides = array<i32>} : memref<8x128xf32, #tpu.memory_space<vmem>>, vector<8x128xf32>,
    return
  }
  func.func @transform_0(%arg0: i32) -> (i32, i32) {
    %c0_i32 = arith.constant 0 : i32
    %c0_i32_0 = arith.constant 0 : i32
    return %arg0, %c0_i32 : i32, i32
  }
  func.func @transform_1(%arg0: i32) -> (i32, i32, i32) {
    %c0_i32 = arith.constant 0 : i32
    %c0_i32_0 = arith.constant 0 : i32
    %c0_i32_1 = arith.constant 0 : i32
    %c0_i32_2 = arith.constant 0 : i32
    return %c0_i32, %c0_i32_0, %c0_i32_1 : i32, i32, i32
  }
  func.func @transform_2(%arg0: i32) -> (i32, i32, i32) {
    %c0_i32 = arith.constant 0 : i32
    %c0_i32_0 = arith.constant 0 : i32
    %c0_i32_1 = arith.constant 0 : i32
    %c0_i32_2 = arith.constant 0 : i32
    return %c0_i32, %c0_i32_0, %c0_i32_1 : i32, i32, i32
  }
  func.func @transform_3(%arg0: i32) -> (i32, i32, i32) {
    %c0_i32 = arith.constant 0 : i32
    %c0_i32_0 = arith.constant 0 : i32
    %c0_i32_1 = arith.constant 0 : i32
    %c0_i32_2 = arith.constant 0 : i32
    return %c0_i32, %c0_i32_0, %c0_i32_1 : i32, i32, i32
  }
  func.func @transform_4(%arg0: i32) -> (i32, i32) {
    %c0_i32 = arith.constant 0 : i32
    %c0_i32_0 = arith.constant 0 : i32
    return %arg0, %c0_i32 : i32, i32
  }
}

module attributes {stable_mosaic.version = 11 : i64} {
  func.func @_euler_kernel_resident(%arg0: i32, %arg1: memref<8x128xf32, #tpu.memory_space<vmem>>, %arg2: memref<3x128x128xbf16, #tpu.memory_space<vmem>>, %arg3: memref<3x1x128xf32, #tpu.memory_space<vmem>>, %arg4: memref<3x128x128xbf16, #tpu.memory_space<vmem>>, %arg5: memref<8x128xf32, #tpu.memory_space<vmem>>, %arg6: memref<8x128xf32, #tpu.memory_space<vmem>>) attributes {dimension_semantics = [#tpu.dimension_semantics<parallel>], iteration_bounds = array<i64: 1>, scalar_prefetch = 0 : i64, scratch_operands = 1 : i64, tpu.core_type = #tpu.core_type<tc>, window_params = [{transform_indices = @transform_0, window_bounds = array<i64: 8, 128>}, {pipeline_mode = #tpu.pipeline_mode<synchronous>, transform_indices = @transform_1, window_bounds = array<i64: 3, 128, 128>}, {pipeline_mode = #tpu.pipeline_mode<synchronous>, transform_indices = @transform_2, window_bounds = array<i64: 3, 1, 128>}, {pipeline_mode = #tpu.pipeline_mode<synchronous>, transform_indices = @transform_3, window_bounds = array<i64: 3, 128, 128>}, {transform_indices = @transform_4, window_bounds = array<i64: 8, 128>}]} {
    %c0 = arith.constant 0 : index
    %c0_0 = arith.constant 0 : index
    %0 = vector.load %arg1[%c0, %c0_0] : memref<8x128xf32, #tpu.memory_space<vmem>>, vector<8x128xf32>
    %1 = tpu.iota {dimensions = array<i32: 1>} : vector<8x128xi32>
    %c64_i32 = arith.constant 64 : i32
    %2 = vector.broadcast %c64_i32 : i32 to vector<8x128xi32>
    %3 = arith.cmpi slt, %1, %2 : vector<8x128xi32>
    %c64_i32_1 = arith.constant 64 : i32
    %4 = tpu.dynamic_rotate %0 by %c64_i32_1 dim 1 : vector<8x128xf32>, i32 -> vector<8x128xf32>
    %5 = arith.addf %0, %4 : vector<8x128xf32>
    %c0_i32 = arith.constant 0 : i32
    %c64_i32_2 = arith.constant 64 : i32
    %6 = tpu.dynamic_rotate %5 by %c64_i32_2 dim 1 : vector<8x128xf32>, i32 -> vector<8x128xf32>
    %7 = arith.select %3, %5, %6 : vector<8x128xi1>, vector<8x128xf32>
    %8 = arith.truncf %5 : vector<8x128xf32> to vector<8x128xbf16>
    %9 = arith.index_cast %c0_i32 : i32 to index
    %c0_3 = arith.constant 0 : index
    %c0_4 = arith.constant 0 : index
    %10 = vector.load %arg2[%9, %c0_3, %c0_4] : memref<3x128x128xbf16, #tpu.memory_space<vmem>>, vector<1x128x128xbf16>
    %11 = vector.shape_cast %10 : vector<1x128x128xbf16> to vector<128x128xbf16>
    %cst = arith.constant dense<0.000000e+00> : vector<8x128xf32>
    %12 = tpu.matmul %8, %11, %cst {dimension_numbers = #tpu.dot_dimension_numbers<[1], [0], [0], [1], [0, 0, 1, 1], [], []>} : vector<8x128xbf16>, vector<128x128xbf16>, vector<8x128xf32> -> vector<8x128xf32>
    %13 = arith.index_cast %c0_i32 : i32 to index
    %c0_5 = arith.constant 0 : index
    %c0_6 = arith.constant 0 : index
    %14 = vector.load %arg3[%13, %c0_5, %c0_6] : memref<3x1x128xf32, #tpu.memory_space<vmem>>, vector<1x1x128xf32>
    %15 = vector.shape_cast %14 : vector<1x1x128xf32> to vector<1x128xf32>
    %16 = vector.broadcast %15 : vector<1x128xf32> to vector<8x128xf32>
    %17 = arith.addf %12, %16 : vector<8x128xf32>
    %18 = math.tanh %17 : vector<8x128xf32>
    %19 = arith.truncf %18 : vector<8x128xf32> to vector<8x128xbf16>
    %20 = arith.index_cast %c0_i32 : i32 to index
    %c0_7 = arith.constant 0 : index
    %c0_8 = arith.constant 0 : index
    %21 = vector.load %arg4[%20, %c0_7, %c0_8] : memref<3x128x128xbf16, #tpu.memory_space<vmem>>, vector<1x128x128xbf16>
    %22 = vector.shape_cast %21 : vector<1x128x128xbf16> to vector<128x128xbf16>
    %cst_9 = arith.constant dense<0.000000e+00> : vector<8x128xf32>
    %23 = tpu.matmul %19, %22, %cst_9 {dimension_numbers = #tpu.dot_dimension_numbers<[1], [0], [0], [1], [0, 0, 1, 1], [], []>} : vector<8x128xbf16>, vector<128x128xbf16>, vector<8x128xf32> -> vector<8x128xf32>
    %24 = arith.addf %7, %23 : vector<8x128xf32>
    %c1_i32 = arith.constant 1 : i32
    %c64_i32_10 = arith.constant 64 : i32
    %25 = tpu.dynamic_rotate %24 by %c64_i32_10 dim 1 : vector<8x128xf32>, i32 -> vector<8x128xf32>
    %26 = arith.select %3, %24, %25 : vector<8x128xi1>, vector<8x128xf32>
    %27 = arith.truncf %24 : vector<8x128xf32> to vector<8x128xbf16>
    %28 = arith.index_cast %c1_i32 : i32 to index
    %c0_11 = arith.constant 0 : index
    %c0_12 = arith.constant 0 : index
    %29 = vector.load %arg2[%28, %c0_11, %c0_12] : memref<3x128x128xbf16, #tpu.memory_space<vmem>>, vector<1x128x128xbf16>
    %30 = vector.shape_cast %29 : vector<1x128x128xbf16> to vector<128x128xbf16>
    %cst_13 = arith.constant dense<0.000000e+00> : vector<8x128xf32>
    %31 = tpu.matmul %27, %30, %cst_13 {dimension_numbers = #tpu.dot_dimension_numbers<[1], [0], [0], [1], [0, 0, 1, 1], [], []>} : vector<8x128xbf16>, vector<128x128xbf16>, vector<8x128xf32> -> vector<8x128xf32>
    %32 = arith.index_cast %c1_i32 : i32 to index
    %c0_14 = arith.constant 0 : index
    %c0_15 = arith.constant 0 : index
    %33 = vector.load %arg3[%32, %c0_14, %c0_15] : memref<3x1x128xf32, #tpu.memory_space<vmem>>, vector<1x1x128xf32>
    %34 = vector.shape_cast %33 : vector<1x1x128xf32> to vector<1x128xf32>
    %35 = vector.broadcast %34 : vector<1x128xf32> to vector<8x128xf32>
    %36 = arith.addf %31, %35 : vector<8x128xf32>
    %37 = math.tanh %36 : vector<8x128xf32>
    %38 = arith.truncf %37 : vector<8x128xf32> to vector<8x128xbf16>
    %39 = arith.index_cast %c1_i32 : i32 to index
    %c0_16 = arith.constant 0 : index
    %c0_17 = arith.constant 0 : index
    %40 = vector.load %arg4[%39, %c0_16, %c0_17] : memref<3x128x128xbf16, #tpu.memory_space<vmem>>, vector<1x128x128xbf16>
    %41 = vector.shape_cast %40 : vector<1x128x128xbf16> to vector<128x128xbf16>
    %cst_18 = arith.constant dense<0.000000e+00> : vector<8x128xf32>
    %42 = tpu.matmul %38, %41, %cst_18 {dimension_numbers = #tpu.dot_dimension_numbers<[1], [0], [0], [1], [0, 0, 1, 1], [], []>} : vector<8x128xbf16>, vector<128x128xbf16>, vector<8x128xf32> -> vector<8x128xf32>
    %43 = arith.addf %26, %42 : vector<8x128xf32>
    %c2_i32 = arith.constant 2 : i32
    %c64_i32_19 = arith.constant 64 : i32
    %44 = tpu.dynamic_rotate %43 by %c64_i32_19 dim 1 : vector<8x128xf32>, i32 -> vector<8x128xf32>
    %45 = arith.select %3, %43, %44 : vector<8x128xi1>, vector<8x128xf32>
    %46 = arith.truncf %43 : vector<8x128xf32> to vector<8x128xbf16>
    %47 = arith.index_cast %c2_i32 : i32 to index
    %c0_20 = arith.constant 0 : index
    %c0_21 = arith.constant 0 : index
    %48 = vector.load %arg2[%47, %c0_20, %c0_21] : memref<3x128x128xbf16, #tpu.memory_space<vmem>>, vector<1x128x128xbf16>
    %49 = vector.shape_cast %48 : vector<1x128x128xbf16> to vector<128x128xbf16>
    %cst_22 = arith.constant dense<0.000000e+00> : vector<8x128xf32>
    %50 = tpu.matmul %46, %49, %cst_22 {dimension_numbers = #tpu.dot_dimension_numbers<[1], [0], [0], [1], [0, 0, 1, 1], [], []>} : vector<8x128xbf16>, vector<128x128xbf16>, vector<8x128xf32> -> vector<8x128xf32>
    %51 = arith.index_cast %c2_i32 : i32 to index
    %c0_23 = arith.constant 0 : index
    %c0_24 = arith.constant 0 : index
    %52 = vector.load %arg3[%51, %c0_23, %c0_24] : memref<3x1x128xf32, #tpu.memory_space<vmem>>, vector<1x1x128xf32>
    %53 = vector.shape_cast %52 : vector<1x1x128xf32> to vector<1x128xf32>
    %54 = vector.broadcast %53 : vector<1x128xf32> to vector<8x128xf32>
    %55 = arith.addf %50, %54 : vector<8x128xf32>
    %56 = math.tanh %55 : vector<8x128xf32>
    %57 = arith.truncf %56 : vector<8x128xf32> to vector<8x128xbf16>
    %58 = arith.index_cast %c2_i32 : i32 to index
    %c0_25 = arith.constant 0 : index
    %c0_26 = arith.constant 0 : index
    %59 = vector.load %arg4[%58, %c0_25, %c0_26] : memref<3x128x128xbf16, #tpu.memory_space<vmem>>, vector<1x128x128xbf16>
    %60 = vector.shape_cast %59 : vector<1x128x128xbf16> to vector<128x128xbf16>
    %cst_27 = arith.constant dense<0.000000e+00> : vector<8x128xf32>
    %61 = tpu.matmul %57, %60, %cst_27 {dimension_numbers = #tpu.dot_dimension_numbers<[1], [0], [0], [1], [0, 0, 1, 1], [], []>} : vector<8x128xbf16>, vector<128x128xbf16>, vector<8x128xf32> -> vector<8x128xf32>
    %62 = arith.addf %45, %61 : vector<8x128xf32>
    %c3_i32 = arith.constant 3 : i32
    %c0_28 = arith.constant 0 : index
    %c0_29 = arith.constant 0 : index
    %63 = vector.load %arg5[%c0_28, %c0_29] : memref<8x128xf32, #tpu.memory_space<vmem>>, vector<8x128xf32>
    tpu.vector_store %arg5[%c0_28, %c0_29], %62 {strides = array<i32>} : memref<8x128xf32, #tpu.memory_space<vmem>>, vector<8x128xf32>,
    return
  }
  func.func @transform_0(%arg0: i32) -> (i32, i32) {
    %c0_i32 = arith.constant 0 : i32
    %c0_i32_0 = arith.constant 0 : i32
    return %arg0, %c0_i32 : i32, i32
  }
  func.func @transform_1(%arg0: i32) -> (i32, i32, i32) {
    %c0_i32 = arith.constant 0 : i32
    %c0_i32_0 = arith.constant 0 : i32
    %c0_i32_1 = arith.constant 0 : i32
    %c0_i32_2 = arith.constant 0 : i32
    return %c0_i32, %c0_i32_0, %c0_i32_1 : i32, i32, i32
  }
  func.func @transform_2(%arg0: i32) -> (i32, i32, i32) {
    %c0_i32 = arith.constant 0 : i32
    %c0_i32_0 = arith.constant 0 : i32
    %c0_i32_1 = arith.constant 0 : i32
    %c0_i32_2 = arith.constant 0 : i32
    return %c0_i32, %c0_i32_0, %c0_i32_1 : i32, i32, i32
  }
  func.func @transform_3(%arg0: i32) -> (i32, i32, i32) {
    %c0_i32 = arith.constant 0 : i32
    %c0_i32_0 = arith.constant 0 : i32
    %c0_i32_1 = arith.constant 0 : i32
    %c0_i32_2 = arith.constant 0 : i32
    return %c0_i32, %c0_i32_0, %c0_i32_1 : i32, i32, i32
  }
  func.func @transform_4(%arg0: i32) -> (i32, i32) {
    %c0_i32 = arith.constant 0 : i32
    %c0_i32_0 = arith.constant 0 : i32
    return %arg0, %c0_i32 : i32, i32
  }
}

</mosaic_0001>

<llo_original>
// kernel: tpu_custom_call.1
$region0: #{tpu_custom_call.1}
  #allocation0 [shape = 'u32[]', space=smem, size = 0x4, offset = 0x4, fixed_abs, tag = 'smem constant byte address 0x4 - core index']
  #allocation1 [shape = 'u32[144,128]{1,0:T(1,128)}', space=vmem, size = 0x12000, scoped, tag = 'internal scratch']
  #allocation2 [shape = 'f32[8,128]{1,0:T(8,128)}', space=vmem, size = 0x1000, scoped, tag = 'scratch operand']
  %s0 = inlined_call_operand.hbm [shape: f32[8,128], index: 0, kind: input, shape index: {}]
  %s1 = inlined_call_operand.hbm [shape: bf16[3,128,128], index: 1, kind: input, shape index: {}]
  %s2 = inlined_call_operand.vmem [shape: f32[3,1,128], index: 2, kind: input, shape index: {}]
  %s3 = inlined_call_operand.hbm [shape: bf16[3,128,128], index: 3, kind: input, shape index: {}]
  %s4 = inlined_call_operand.hbm [shape: f32[8,128], index: 4, kind: output, shape index: {}]
  %s5 = sld [smem:[#allocation0]]
  $region38: #{tpu_custom_call.1} parent=0
    _
  %s7 = ssub.s32 1, %s5
  %s8 = scalar_select 0, %s7, %s5
  $region1: #{tpu_custom_call.1} parent=0
    #allocation3 [shape = 'u8[4096]{0}', space=vmem, size = 0x1000, scoped, tag = 'input window, operand 0, single buffered']
    #allocation4 [shape = 's32[1]{0}', space=sflag, size = 0x4, scoped, tag = 'scoped memory for tpu_custom_call.1']
    #allocation5 [shape = 's32[1]{0}', space=sflag, size = 0x4, scoped, tag = 'scoped memory for tpu_custom_call.1']
    #allocation6 [shape = 'u8[98304]{0}', space=vmem, size = 0x18000, scoped, tag = 'input window, operand 1, single buffered']
    #allocation7 [shape = 's32[1]{0}', space=sflag, size = 0x4, scoped, tag = 'scoped memory for tpu_custom_call.1']
    #allocation8 [shape = 'u8[98304]{0}', space=vmem, size = 0x18000, scoped, tag = 'input window, operand 3, single buffered']
    #allocation9 [shape = 'u8[4096]{0}', space=vmem, size = 0x1000, scoped, tag = 'output window, operand 0, single buffered']
    %9 = vsyncpa [#allocation4], 0
    %10 = vsyncpa [#allocation7], 0
    %11 = vsyncpa [#allocation5], 0
    // Predicated region
    $region2: #{tpu_custom_call.1} parent=1 // pred_check
      _
    $region3: #{tpu_custom_call.1} parent=1 // pred_check_branch
      %13 = sbr.rel (0) target = $region5
    $region4: #{tpu_custom_call.1} parent=1 // pred_region
      %s15 = ssub.s32 128, 128
      %16 = vsyncadd [#allocation4], %s15
      %s18 = sshll.u32 [#allocation3], 4
      %s19 = int_to_ptr.vmem [resolvable:$true] %s18
      %21 = dma.hbm_to_vmem [thread:$0]  %s0, 128, %s19, [#allocation4]
    $region5: #{tpu_custom_call.1} parent=1 // pred_fallthru
      _
    // Predicated region
    $region6: #{tpu_custom_call.1} parent=1 // pred_check
      _
    $region7: #{tpu_custom_call.1} parent=1 // pred_check_branch
      %23 = sbr.rel (0) target = $region9
    $region8: #{tpu_custom_call.1} parent=1 // pred_region
      %s25 = ssub.s32 3072, 3072
      %26 = vsyncadd [#allocation7], %s25
      %s27 = sshll.u32 [#allocation6], 4
      %s28 = int_to_ptr.vmem [resolvable:$true] %s27
      %33 = dma.hbm_to_vmem [thread:$0]  %s1, 3072, %s28, [#allocation7], 64, 64, 4
    $region9: #{tpu_custom_call.1} parent=1 // pred_fallthru
      _
    // Predicated region
    $region10: #{tpu_custom_call.1} parent=1 // pred_check
      _
    $region11: #{tpu_custom_call.1} parent=1 // pred_check_branch
      %35 = sbr.rel (0) target = $region13
    $region12: #{tpu_custom_call.1} parent=1 // pred_region
      _
    $region13: #{tpu_custom_call.1} parent=1 // pred_fallthru
      _
    // Predicated region
    $region14: #{tpu_custom_call.1} parent=1 // pred_check
      _
    $region15: #{tpu_custom_call.1} parent=1 // pred_check_branch
      %37 = sbr.rel (0) target = $region17
    $region16: #{tpu_custom_call.1} parent=1 // pred_region
      %s39 = ssub.s32 3072, 3072
      %40 = vsyncadd [#allocation7], %s39
      %s41 = sshll.u32 [#allocation8], 4
      %s42 = int_to_ptr.vmem [resolvable:$true] %s41
      %47 = dma.hbm_to_vmem [thread:$0]  %s3, 3072, %s42, [#allocation7], 64, 64, 4
    $region17: #{tpu_custom_call.1} parent=1 // pred_fallthru
      _
    // Predicated region
    $region18: #{tpu_custom_call.1} parent=1 // pred_check
      _
    $region19: #{tpu_custom_call.1} parent=1 // pred_check_branch
      %49 = sbr.rel (0) target = $region21
    $region20: #{tpu_custom_call.1} parent=1 // pred_region
      %50 = dma.done [#allocation4], 128
    $region21: #{tpu_custom_call.1} parent=1 // pred_fallthru
      _
    // Predicated region
    $region22: #{tpu_custom_call.1} parent=1 // pred_check
      _
    $region23: #{tpu_custom_call.1} parent=1 // pred_check_branch
      %52 = sbr.rel (0) target = $region25
    $region24: #{tpu_custom_call.1} parent=1 // pred_region
      %53 = dma.done [#allocation7], 3072
    $region25: #{tpu_custom_call.1} parent=1 // pred_fallthru
      _
    // Predicated region
    $region26: #{tpu_custom_call.1} parent=1 // pred_check
      _
    $region27: #{tpu_custom_call.1} parent=1 // pred_check_branch
      %55 = sbr.rel (0) target = $region29
    $region28: #{tpu_custom_call.1} parent=1 // pred_region
      %56 = dma.done [#allocation7], 3072
    $region29: #{tpu_custom_call.1} parent=1 // pred_fallthru
      _
    %v58 = vld [vmem:[#allocation3] sm:$0xff]
    %v59 = vlaneseq
    %v60 = vand.u32 %v59, 127
    %vm61 = vcmp.lt.s32.totalorder %v60, 64
    %62 = vrot.lane.b32.xlu0 %v58, 64
    %v63 = vpop.permute.xlu0 %62
    %v64 = vadd.f32 %v58, %v63
    %65 = vrot.lane.b32.xlu0 %v64, 64
    %v66 = vpop.permute.xlu0 %65
    %v67 = vsel %vm61, %v64, %v66
    %v68 = vpack.c.bf16 %v64, %v64
    %v69 = vld [vmem:[#allocation6] sm:$0xf]
    %v70 = vld [vmem:[#allocation6 + $0x4] sm:$0xf]
    %v71 = vld [vmem:[#allocation6 + $0x8] sm:$0xf]
    %v72 = vld [vmem:[#allocation6 + $0xc] sm:$0xf]
    %v73 = vld [vmem:[#allocation6 + $0x10] sm:$0xf]
    %v74 = vld [vmem:[#allocation6 + $0x14] sm:$0xf]
    %v75 = vld [vmem:[#allocation6 + $0x18] sm:$0xf]
    %v76 = vld [vmem:[#allocation6 + $0x1c] sm:$0xf]
    %v77 = vld [vmem:[#allocation6 + $0x20] sm:$0xf]
    %v78 = vld [vmem:[#allocation6 + $0x24] sm:$0xf]
    %v79 = vld [vmem:[#allocation6 + $0x28] sm:$0xf]
    %v80 = vld [vmem:[#allocation6 + $0x2c] sm:$0xf]
    %v81 = vld [vmem:[#allocation6 + $0x30] sm:$0xf]
    %v82 = vld [vmem:[#allocation6 + $0x34] sm:$0xf]
    %v83 = vld [vmem:[#allocation6 + $0x38] sm:$0xf]
    %v84 = vld [vmem:[#allocation6 + $0x3c] sm:$0xf]
    %v85 = vld [vmem:[%s2] sm:$0x1]
    %v87 = vlaneseq
    %v88 = vshrl.u32 %v87, 7
    %v89 = vsub.s32 0, %v88
    %v90 = vrot.slane %v85, %v89
    %v108 = vunpack.c.l.b16 %v69
    %v109 = vunpack.c.l.b16 %v70
    %v110 = vunpack.c.l.b16 %v71
    %v111 = vunpack.c.l.b16 %v72
    %v112 = vunpack.c.l.b16 %v73
    %v113 = vunpack.c.l.b16 %v74
    %v114 = vunpack.c.l.b16 %v75
    %v115 = vunpack.c.l.b16 %v76
    %v116 = vunpack.c.l.b16 %v77
    %v117 = vunpack.c.l.b16 %v78
    %v118 = vunpack.c.l.b16 %v79
    %v119 = vunpack.c.l.b16 %v80
    %v120 = vunpack.c.l.b16 %v81
    %v121 = vunpack.c.l.b16 %v82
    %v122 = vunpack.c.l.b16 %v83
    %v123 = vunpack.c.l.b16 %v84
    %v124 = vpack.c.b16 %v109, %v108
    %v125 = vpack.c.b16 %v111, %v110
    %v126 = vpack.c.b16 %v113, %v112
    %v127 = vpack.c.b16 %v115, %v114
    %v128 = vpack.c.b16 %v117, %v116
    %v129 = vpack.c.b16 %v119, %v118
    %v130 = vpack.c.b16 %v121, %v120
    %v131 = vpack.c.b16 %v123, %v122
    %140 = vmatprep.subr.bf16.mxu0 0
    %141 = vmatpush1.bf16.msra.mxu0 %v124
    %142 = vmatprep.subr.bf16.mxu0 0
    %143 = vmatpush1.bf16.msra.mxu0 %v125
    %144 = vmatprep.subr.bf16.mxu0 0
    %145 = vmatpush1.bf16.msra.mxu0 %v126
    %146 = vmatprep.subr.bf16.mxu0 0
    %147 = vmatpush1.bf16.msra.mxu0 %v127
    %148 = vmatprep.subr.bf16.mxu0 0
    %149 = vmatpush1.bf16.msra.mxu0 %v128
    %150 = vmatprep.subr.bf16.mxu0 0
    %151 = vmatpush1.bf16.msra.mxu0 %v129
    %152 = vmatprep.subr.bf16.mxu0 0
    %153 = vmatpush1.bf16.msra.mxu0 %v130
    %154 = vmatprep.subr.bf16.mxu0 0
    %155 = vmatpush1.bf16.msra.mxu0 %v131
    %156 = vmatprep.subr.bf16.mxu0 0
    %157 = vmatpush1.bf16.msra.mxu0 0
    %158 = vmatprep.subr.bf16.mxu0 0
    %159 = vmatpush1.bf16.msra.mxu0 0
    %160 = vmatprep.subr.bf16.mxu0 0
    %161 = vmatpush1.bf16.msra.mxu0 0
    %162 = vmatprep.subr.bf16.mxu0 0
    %163 = vmatpush1.bf16.msra.mxu0 0
    %164 = vmatprep.subr.bf16.mxu0 0
    %165 = vmatpush1.bf16.msra.mxu0 0
    %166 = vmatprep.subr.bf16.mxu0 0
    %167 = vmatpush1.bf16.msra.mxu0 0
    %168 = vmatprep.subr.bf16.mxu0 0
    %169 = vmatpush1.bf16.msra.mxu0 0
    %170 = vmatprep.subr.bf16.mxu0 0
    %171 = vmatpush1.bf16.msra.mxu0 0
    %172 = vmatprep.mubr.bf16.mxu0 0
    %173 = vmatmul.mubr.bf16.gmra.mrb[0].mxu0 %v68
    %v174 = vpop.f32.mrb[0].mxu0
    %v175 = vadd.f32 %v90, %v174
    %v176 = vpop.f32.mrb[0].mxu0
    %v177 = vpop.f32.mrb[0].mxu0
    %v178 = vpop.f32.mrb[0].mxu0
    %179 = vdwg.mxu0
    %v180 = vtanh.pop %v175
    %v181 = vpack.c.bf16 %v180, %v180
    %v182 = vld [vmem:[#allocation8] sm:$0xf]
    %v183 = vld [vmem:[#allocation8 + $0x4] sm:$0xf]
    %v184 = vld [vmem:[#allocation8 + $0x8] sm:$0xf]
    %v185 = vld [vmem:[#allocation8 + $0xc] sm:$0xf]
    %v186 = vld [vmem:[#allocation8 + $0x10] sm:$0xf]
    %v187 = vld [vmem:[#allocation8 + $0x14] sm:$0xf]
    %v188 = vld [vmem:[#allocation8 + $0x18] sm:$0xf]
    %v189 = vld [vmem:[#allocation8 + $0x1c] sm:$0xf]
    %v190 = vld [vmem:[#allocation8 + $0x20] sm:$0xf]
    %v191 = vld [vmem:[#allocation8 + $0x24] sm:$0xf]
    %v192 = vld [vmem:[#allocation8 + $0x28] sm:$0xf]
    %v193 = vld [vmem:[#allocation8 + $0x2c] sm:$0xf]
    %v194 = vld [vmem:[#allocation8 + $0x30] sm:$0xf]
    %v195 = vld [vmem:[#allocation8 + $0x34] sm:$0xf]
    %v196 = vld [vmem:[#allocation8 + $0x38] sm:$0xf]
    %v197 = vld [vmem:[#allocation8 + $0x3c] sm:$0xf]
    %v214 = vunpack.c.l.b16 %v182
    %v215 = vunpack.c.l.b16 %v183
    %v216 = vunpack.c.l.b16 %v184
    %v217 = vunpack.c.l.b16 %v185
    %v218 = vunpack.c.l.b16 %v186
    %v219 = vunpack.c.l.b16 %v187
    %v220 = vunpack.c.l.b16 %v188
    %v221 = vunpack.c.l.b16 %v189
    %v222 = vunpack.c.l.b16 %v190
    %v223 = vunpack.c.l.b16 %v191
    %v224 = vunpack.c.l.b16 %v192
    %v225 = vunpack.c.l.b16 %v193
    %v226 = vunpack.c.l.b16 %v194
    %v227 = vunpack.c.l.b16 %v195
    %v228 = vunpack.c.l.b16 %v196
    %v229 = vunpack.c.l.b16 %v197
    %v230 = vpack.c.b16 %v215, %v214
    %v231 = vpack.c.b16 %v217, %v216
    %v232 = vpack.c.b16 %v219, %v218
    %v233 = vpack.c.b16 %v221, %v220
    %v234 = vpack.c.b16 %v223, %v222
    %v235 = vpack.c.b16 %v225, %v224
    %v236 = vpack.c.b16 %v227, %v226
    %v237 = vpack.c.b16 %v229, %v228
    %246 = vmatprep.subr.bf16.mxu0 0
    %247 = vmatpush1.bf16.msra.mxu0 %v230
    %248 = vmatprep.subr.bf16.mxu0 0
    %249 = vmatpush1.bf16.msra.mxu0 %v231
    %250 = vmatprep.subr.bf16.mxu0 0
    %251 = vmatpush1.bf16.msra.mxu0 %v232
    %252 = vmatprep.subr.bf16.mxu0 0
    %253 = vmatpush1.bf16.msra.mxu0 %v233
    %254 = vmatprep.subr.bf16.mxu0 0
    %255 = vmatpush1.bf16.msra.mxu0 %v234
    %256 = vmatprep.subr.bf16.mxu0 0
    %257 = vmatpush1.bf16.msra.mxu0 %v235
    %258 = vmatprep.subr.bf16.mxu0 0
    %259 = vmatpush1.bf16.msra.mxu0 %v236
    %260 = vmatprep.subr.bf16.mxu0 0
    %261 = vmatpush1.bf16.msra.mxu0 %v237
    %262 = vmatprep.subr.bf16.mxu0 0
    %263 = vmatpush1.bf16.msra.mxu0 0
    %264 = vmatprep.subr.bf16.mxu0 0
    %265 = vmatpush1.bf16.msra.mxu0 0
    %266 = vmatprep.subr.bf16.mxu0 0
    %267 = vmatpush1.bf16.msra.mxu0 0
    %268 = vmatprep.subr.bf16.mxu0 0
    %269 = vmatpush1.bf16.msra.mxu0 0
    %270 = vmatprep.subr.bf16.mxu0 0
    %271 = vmatpush1.bf16.msra.mxu0 0
    %272 = vmatprep.subr.bf16.mxu0 0
    %273 = vmatpush1.bf16.msra.mxu0 0
    %274 = vmatprep.subr.bf16.mxu0 0
    %275 = vmatpush1.bf16.msra.mxu0 0
    %276 = vmatprep.subr.bf16.mxu0 0
    %277 = vmatpush1.bf16.msra.mxu0 0
    %278 = vmatprep.mubr.bf16.mxu0 0
    %279 = vmatmul.mubr.bf16.gmra.mrb[0].mxu0 %v181
    %v280 = vpop.f32.mrb[0].mxu0
    %v281 = vadd.f32 0.0, %v280
    %v282 = vpop.f32.mrb[0].mxu0
    %v283 = vpop.f32.mrb[0].mxu0
    %v284 = vpop.f32.mrb[0].mxu0
    %285 = vdwg.mxu0
    %v286 = vadd.f32 %v67, %v281
    %287 = vrot.lane.b32.xlu0 %v286, 64
    %v288 = vpop.permute.xlu0 %287
    %v289 = vsel %vm61, %v286, %v288
    %v290 = vpack.c.bf16 %v286, %v286
    %s291 = scalar_lea.vmem [#allocation6], 64
    %v292 = vld [vmem:[%s291] sm:$0xf]
    %v293 = vld [vmem:[%s291 + $0x4] sm:$0xf]
    %v294 = vld [vmem:[%s291 + $0x8] sm:$0xf]
    %v295 = vld [vmem:[%s291 + $0xc] sm:$0xf]
    %v296 = vld [vmem:[%s291 + $0x10] sm:$0xf]
    %v297 = vld [vmem:[%s291 + $0x14] sm:$0xf]
    %v298 = vld [vmem:[%s291 + $0x18] sm:$0xf]
    %v299 = vld [vmem:[%s291 + $0x1c] sm:$0xf]
    %v300 = vld [vmem:[%s291 + $0x20] sm:$0xf]
    %v301 = vld [vmem:[%s291 + $0x24] sm:$0xf]
    %v302 = vld [vmem:[%s291 + $0x28] sm:$0xf]
    %v303 = vld [vmem:[%s291 + $0x2c] sm:$0xf]
    %v304 = vld [vmem:[%s291 + $0x30] sm:$0xf]
    %v305 = vld [vmem:[%s291 + $0x34] sm:$0xf]
    %v306 = vld [vmem:[%s291 + $0x38] sm:$0xf]
    %v307 = vld [vmem:[%s291 + $0x3c] sm:$0xf]
    %s308 = scalar_lea.vmem %s2, 1
    %v309 = vld [vmem:[%s308] sm:$0x1]
    %v311 = vlaneseq
    %v312 = vshrl.u32 %v311, 7
    %v313 = vsub.s32 0, %v312
    %v314 = vrot.slane %v309, %v313
    %v332 = vunpack.c.l.b16 %v292
    %v333 = vunpack.c.l.b16 %v293
    %v334 = vunpack.c.l.b16 %v294
    %v335 = vunpack.c.l.b16 %v295
    %v336 = vunpack.c.l.b16 %v296
    %v337 = vunpack.c.l.b16 %v297
    %v338 = vunpack.c.l.b16 %v298
    %v339 = vunpack.c.l.b16 %v299
    %v340 = vunpack.c.l.b16 %v300
    %v341 = vunpack.c.l.b16 %v301
    %v342 = vunpack.c.l.b16 %v302
    %v343 = vunpack.c.l.b16 %v303
    %v344 = vunpack.c.l.b16 %v304
    %v345 = vunpack.c.l.b16 %v305
    %v346 = vunpack.c.l.b16 %v306
    %v347 = vunpack.c.l.b16 %v307
    %v348 = vpack.c.b16 %v333, %v332
    %v349 = vpack.c.b16 %v335, %v334
    %v350 = vpack.c.b16 %v337, %v336
    %v351 = vpack.c.b16 %v339, %v338
    %v352 = vpack.c.b16 %v341, %v340
    %v353 = vpack.c.b16 %v343, %v342
    %v354 = vpack.c.b16 %v345, %v344
    %v355 = vpack.c.b16 %v347, %v346
    %364 = vmatprep.subr.bf16.mxu0 0
    %365 = vmatpush1.bf16.msra.mxu0 %v348
    %366 = vmatprep.subr.bf16.mxu0 0
    %367 = vmatpush1.bf16.msra.mxu0 %v349
    %368 = vmatprep.subr.bf16.mxu0 0
    %369 = vmatpush1.bf16.msra.mxu0 %v350
    %370 = vmatprep.subr.bf16.mxu0 0
    %371 = vmatpush1.bf16.msra.mxu0 %v351
    %372 = vmatprep.subr.bf16.mxu0 0
    %373 = vmatpush1.bf16.msra.mxu0 %v352
    %374 = vmatprep.subr.bf16.mxu0 0
    %375 = vmatpush1.bf16.msra.mxu0 %v353
    %376 = vmatprep.subr.bf16.mxu0 0
    %377 = vmatpush1.bf16.msra.mxu0 %v354
    %378 = vmatprep.subr.bf16.mxu0 0
    %379 = vmatpush1.bf16.msra.mxu0 %v355
    %380 = vmatprep.subr.bf16.mxu0 0
    %381 = vmatpush1.bf16.msra.mxu0 0
    %382 = vmatprep.subr.bf16.mxu0 0
    %383 = vmatpush1.bf16.msra.mxu0 0
    %384 = vmatprep.subr.bf16.mxu0 0
    %385 = vmatpush1.bf16.msra.mxu0 0
    %386 = vmatprep.subr.bf16.mxu0 0
    %387 = vmatpush1.bf16.msra.mxu0 0
    %388 = vmatprep.subr.bf16.mxu0 0
    %389 = vmatpush1.bf16.msra.mxu0 0
    %390 = vmatprep.subr.bf16.mxu0 0
    %391 = vmatpush1.bf16.msra.mxu0 0
    %392 = vmatprep.subr.bf16.mxu0 0
    %393 = vmatpush1.bf16.msra.mxu0 0
    %394 = vmatprep.subr.bf16.mxu0 0
    %395 = vmatpush1.bf16.msra.mxu0 0
    %396 = vmatprep.mubr.bf16.mxu0 0
    %397 = vmatmul.mubr.bf16.gmra.mrb[0].mxu0 %v290
    %v398 = vpop.f32.mrb[0].mxu0
    %v399 = vadd.f32 %v314, %v398
    %v400 = vpop.f32.mrb[0].mxu0
    %v401 = vpop.f32.mrb[0].mxu0
    %v402 = vpop.f32.mrb[0].mxu0
    %403 = vdwg.mxu0
    %v404 = vtanh.pop %v399
    %v405 = vpack.c.bf16 %v404, %v404
    %s406 = scalar_lea.vmem [#allocation8], 64
    %v407 = vld [vmem:[%s406] sm:$0xf]
    %v408 = vld [vmem:[%s406 + $0x4] sm:$0xf]
    %v409 = vld [vmem:[%s406 + $0x8] sm:$0xf]
    %v410 = vld [vmem:[%s406 + $0xc] sm:$0xf]
    %v411 = vld [vmem:[%s406 + $0x10] sm:$0xf]
    %v412 = vld [vmem:[%s406 + $0x14] sm:$0xf]
    %v413 = vld [vmem:[%s406 + $0x18] sm:$0xf]
    %v414 = vld [vmem:[%s406 + $0x1c] sm:$0xf]
    %v415 = vld [vmem:[%s406 + $0x20] sm:$0xf]
    %v416 = vld [vmem:[%s406 + $0x24] sm:$0xf]
    %v417 = vld [vmem:[%s406 + $0x28] sm:$0xf]
    %v418 = vld [vmem:[%s406 + $0x2c] sm:$0xf]
    %v419 = vld [vmem:[%s406 + $0x30] sm:$0xf]
    %v420 = vld [vmem:[%s406 + $0x34] sm:$0xf]
    %v421 = vld [vmem:[%s406 + $0x38] sm:$0xf]
    %v422 = vld [vmem:[%s406 + $0x3c] sm:$0xf]
    %v439 = vunpack.c.l.b16 %v407
    %v440 = vunpack.c.l.b16 %v408
    %v441 = vunpack.c.l.b16 %v409
    %v442 = vunpack.c.l.b16 %v410
    %v443 = vunpack.c.l.b16 %v411
    %v444 = vunpack.c.l.b16 %v412
    %v445 = vunpack.c.l.b16 %v413
    %v446 = vunpack.c.l.b16 %v414
    %v447 = vunpack.c.l.b16 %v415
    %v448 = vunpack.c.l.b16 %v416
    %v449 = vunpack.c.l.b16 %v417
    %v450 = vunpack.c.l.b16 %v418
    %v451 = vunpack.c.l.b16 %v419
    %v452 = vunpack.c.l.b16 %v420
    %v453 = vunpack.c.l.b16 %v421
    %v454 = vunpack.c.l.b16 %v422
    %v455 = vpack.c.b16 %v440, %v439
    %v456 = vpack.c.b16 %v442, %v441
    %v457 = vpack.c.b16 %v444, %v443
    %v458 = vpack.c.b16 %v446, %v445
    %v459 = vpack.c.b16 %v448, %v447
    %v460 = vpack.c.b16 %v450, %v449
    %v461 = vpack.c.b16 %v452, %v451
    %v462 = vpack.c.b16 %v454, %v453
    %471 = vmatprep.subr.bf16.mxu0 0
    %472 = vmatpush1.bf16.msra.mxu0 %v455
    %473 = vmatprep.subr.bf16.mxu0 0
    %474 = vmatpush1.bf16.msra.mxu0 %v456
    %475 = vmatprep.subr.bf16.mxu0 0
    %476 = vmatpush1.bf16.msra.mxu0 %v457
    %477 = vmatprep.subr.bf16.mxu0 0
    %478 = vmatpush1.bf16.msra.mxu0 %v458
    %479 = vmatprep.subr.bf16.mxu0 0
    %480 = vmatpush1.bf16.msra.mxu0 %v459
    %481 = vmatprep.subr.bf16.mxu0 0
    %482 = vmatpush1.bf16.msra.mxu0 %v460
    %483 = vmatprep.subr.bf16.mxu0 0
    %484 = vmatpush1.bf16.msra.mxu0 %v461
    %485 = vmatprep.subr.bf16.mxu0 0
    %486 = vmatpush1.bf16.msra.mxu0 %v462
    %487 = vmatprep.subr.bf16.mxu0 0
    %488 = vmatpush1.bf16.msra.mxu0 0
    %489 = vmatprep.subr.bf16.mxu0 0
    %490 = vmatpush1.bf16.msra.mxu0 0
    %491 = vmatprep.subr.bf16.mxu0 0
    %492 = vmatpush1.bf16.msra.mxu0 0
    %493 = vmatprep.subr.bf16.mxu0 0
    %494 = vmatpush1.bf16.msra.mxu0 0
    %495 = vmatprep.subr.bf16.mxu0 0
    %496 = vmatpush1.bf16.msra.mxu0 0
    %497 = vmatprep.subr.bf16.mxu0 0
    %498 = vmatpush1.bf16.msra.mxu0 0
    %499 = vmatprep.subr.bf16.mxu0 0
    %500 = vmatpush1.bf16.msra.mxu0 0
    %501 = vmatprep.subr.bf16.mxu0 0
    %502 = vmatpush1.bf16.msra.mxu0 0
    %503 = vmatprep.mubr.bf16.mxu0 0
    %504 = vmatmul.mubr.bf16.gmra.mrb[0].mxu0 %v405
    %v505 = vpop.f32.mrb[0].mxu0
    %v506 = vadd.f32 0.0, %v505
    %v507 = vpop.f32.mrb[0].mxu0
    %v508 = vpop.f32.mrb[0].mxu0
    %v509 = vpop.f32.mrb[0].mxu0
    %510 = vdwg.mxu0
    %v511 = vadd.f32 %v289, %v506
    %512 = vrot.lane.b32.xlu0 %v511, 64
    %v513 = vpop.permute.xlu0 %512
    %v514 = vsel %vm61, %v511, %v513
    %v515 = vpack.c.bf16 %v511, %v511
    %s516 = scalar_lea.vmem [#allocation6], 128
    %v517 = vld [vmem:[%s516] sm:$0xf]
    %v518 = vld [vmem:[%s516 + $0x4] sm:$0xf]
    %v519 = vld [vmem:[%s516 + $0x8] sm:$0xf]
    %v520 = vld [vmem:[%s516 + $0xc] sm:$0xf]
    %v521 = vld [vmem:[%s516 + $0x10] sm:$0xf]
    %v522 = vld [vmem:[%s516 + $0x14] sm:$0xf]
    %v523 = vld [vmem:[%s516 + $0x18] sm:$0xf]
    %v524 = vld [vmem:[%s516 + $0x1c] sm:$0xf]
    %v525 = vld [vmem:[%s516 + $0x20] sm:$0xf]
    %v526 = vld [vmem:[%s516 + $0x24] sm:$0xf]
    %v527 = vld [vmem:[%s516 + $0x28] sm:$0xf]
    %v528 = vld [vmem:[%s516 + $0x2c] sm:$0xf]
    %v529 = vld [vmem:[%s516 + $0x30] sm:$0xf]
    %v530 = vld [vmem:[%s516 + $0x34] sm:$0xf]
    %v531 = vld [vmem:[%s516 + $0x38] sm:$0xf]
    %v532 = vld [vmem:[%s516 + $0x3c] sm:$0xf]
    %s533 = scalar_lea.vmem %s2, 2
    %v534 = vld [vmem:[%s533] sm:$0x1]
    %v536 = vlaneseq
    %v537 = vshrl.u32 %v536, 7
    %v538 = vsub.s32 0, %v537
    %v539 = vrot.slane %v534, %v538
    %v557 = vunpack.c.l.b16 %v517
    %v558 = vunpack.c.l.b16 %v518
    %v559 = vunpack.c.l.b16 %v519
    %v560 = vunpack.c.l.b16 %v520
    %v561 = vunpack.c.l.b16 %v521
    %v562 = vunpack.c.l.b16 %v522
    %v563 = vunpack.c.l.b16 %v523
    %v564 = vunpack.c.l.b16 %v524
    %v565 = vunpack.c.l.b16 %v525
    %v566 = vunpack.c.l.b16 %v526
    %v567 = vunpack.c.l.b16 %v527
    %v568 = vunpack.c.l.b16 %v528
    %v569 = vunpack.c.l.b16 %v529
    %v570 = vunpack.c.l.b16 %v530
    %v571 = vunpack.c.l.b16 %v531
    %v572 = vunpack.c.l.b16 %v532
    %v573 = vpack.c.b16 %v558, %v557
    %v574 = vpack.c.b16 %v560, %v559
    %v575 = vpack.c.b16 %v562, %v561
    %v576 = vpack.c.b16 %v564, %v563
    %v577 = vpack.c.b16 %v566, %v565
    %v578 = vpack.c.b16 %v568, %v567
    %v579 = vpack.c.b16 %v570, %v569
    %v580 = vpack.c.b16 %v572, %v571
    %589 = vmatprep.subr.bf16.mxu0 0
    %590 = vmatpush1.bf16.msra.mxu0 %v573
    %591 = vmatprep.subr.bf16.mxu0 0
    %592 = vmatpush1.bf16.msra.mxu0 %v574
    %593 = vmatprep.subr.bf16.mxu0 0
    %594 = vmatpush1.bf16.msra.mxu0 %v575
    %595 = vmatprep.subr.bf16.mxu0 0
    %596 = vmatpush1.bf16.msra.mxu0 %v576
    %597 = vmatprep.subr.bf16.mxu0 0
    %598 = vmatpush1.bf16.msra.mxu0 %v577
    %599 = vmatprep.subr.bf16.mxu0 0
    %600 = vmatpush1.bf16.msra.mxu0 %v578
    %601 = vmatprep.subr.bf16.mxu0 0
    %602 = vmatpush1.bf16.msra.mxu0 %v579
    %603 = vmatprep.subr.bf16.mxu0 0
    %604 = vmatpush1.bf16.msra.mxu0 %v580
    %605 = vmatprep.subr.bf16.mxu0 0
    %606 = vmatpush1.bf16.msra.mxu0 0
    %607 = vmatprep.subr.bf16.mxu0 0
    %608 = vmatpush1.bf16.msra.mxu0 0
    %609 = vmatprep.subr.bf16.mxu0 0
    %610 = vmatpush1.bf16.msra.mxu0 0
    %611 = vmatprep.subr.bf16.mxu0 0
    %612 = vmatpush1.bf16.msra.mxu0 0
    %613 = vmatprep.subr.bf16.mxu0 0
    %614 = vmatpush1.bf16.msra.mxu0 0
    %615 = vmatprep.subr.bf16.mxu0 0
    %616 = vmatpush1.bf16.msra.mxu0 0
    %617 = vmatprep.subr.bf16.mxu0 0
    %618 = vmatpush1.bf16.msra.mxu0 0
    %619 = vmatprep.subr.bf16.mxu0 0
    %620 = vmatpush1.bf16.msra.mxu0 0
    %621 = vmatprep.mubr.bf16.mxu0 0
    %622 = vmatmul.mubr.bf16.gmra.mrb[0].mxu0 %v515
    %v623 = vpop.f32.mrb[0].mxu0
    %v624 = vadd.f32 %v539, %v623
    %v625 = vpop.f32.mrb[0].mxu0
    %v626 = vpop.f32.mrb[0].mxu0
    %v627 = vpop.f32.mrb[0].mxu0
    %628 = vdwg.mxu0
    %v629 = vtanh.pop %v624
    %v630 = vpack.c.bf16 %v629, %v629
    %s631 = scalar_lea.vmem [#allocation8], 128
    %v632 = vld [vmem:[%s631] sm:$0xf]
    %v633 = vld [vmem:[%s631 + $0x4] sm:$0xf]
    %v634 = vld [vmem:[%s631 + $0x8] sm:$0xf]
    %v635 = vld [vmem:[%s631 + $0xc] sm:$0xf]
    %v636 = vld [vmem:[%s631 + $0x10] sm:$0xf]
    %v637 = vld [vmem:[%s631 + $0x14] sm:$0xf]
    %v638 = vld [vmem:[%s631 + $0x18] sm:$0xf]
    %v639 = vld [vmem:[%s631 + $0x1c] sm:$0xf]
    %v640 = vld [vmem:[%s631 + $0x20] sm:$0xf]
    %v641 = vld [vmem:[%s631 + $0x24] sm:$0xf]
    %v642 = vld [vmem:[%s631 + $0x28] sm:$0xf]
    %v643 = vld [vmem:[%s631 + $0x2c] sm:$0xf]
    %v644 = vld [vmem:[%s631 + $0x30] sm:$0xf]
    %v645 = vld [vmem:[%s631 + $0x34] sm:$0xf]
    %v646 = vld [vmem:[%s631 + $0x38] sm:$0xf]
    %v647 = vld [vmem:[%s631 + $0x3c] sm:$0xf]
    %v664 = vunpack.c.l.b16 %v632
    %v665 = vunpack.c.l.b16 %v633
    %v666 = vunpack.c.l.b16 %v634
    %v667 = vunpack.c.l.b16 %v635
    %v668 = vunpack.c.l.b16 %v636
    %v669 = vunpack.c.l.b16 %v637
    %v670 = vunpack.c.l.b16 %v638
    %v671 = vunpack.c.l.b16 %v639
    %v672 = vunpack.c.l.b16 %v640
    %v673 = vunpack.c.l.b16 %v641
    %v674 = vunpack.c.l.b16 %v642
    %v675 = vunpack.c.l.b16 %v643
    %v676 = vunpack.c.l.b16 %v644
    %v677 = vunpack.c.l.b16 %v645
    %v678 = vunpack.c.l.b16 %v646
    %v679 = vunpack.c.l.b16 %v647
    %v680 = vpack.c.b16 %v665, %v664
    %v681 = vpack.c.b16 %v667, %v666
    %v682 = vpack.c.b16 %v669, %v668
    %v683 = vpack.c.b16 %v671, %v670
    %v684 = vpack.c.b16 %v673, %v672
    %v685 = vpack.c.b16 %v675, %v674
    %v686 = vpack.c.b16 %v677, %v676
    %v687 = vpack.c.b16 %v679, %v678
    %696 = vmatprep.subr.bf16.mxu0 0
    %697 = vmatpush1.bf16.msra.mxu0 %v680
    %698 = vmatprep.subr.bf16.mxu0 0
    %699 = vmatpush1.bf16.msra.mxu0 %v681
    %700 = vmatprep.subr.bf16.mxu0 0
    %701 = vmatpush1.bf16.msra.mxu0 %v682
    %702 = vmatprep.subr.bf16.mxu0 0
    %703 = vmatpush1.bf16.msra.mxu0 %v683
    %704 = vmatprep.subr.bf16.mxu0 0
    %705 = vmatpush1.bf16.msra.mxu0 %v684
    %706 = vmatprep.subr.bf16.mxu0 0
    %707 = vmatpush1.bf16.msra.mxu0 %v685
    %708 = vmatprep.subr.bf16.mxu0 0
    %709 = vmatpush1.bf16.msra.mxu0 %v686
    %710 = vmatprep.subr.bf16.mxu0 0
    %711 = vmatpush1.bf16.msra.mxu0 %v687
    %712 = vmatprep.subr.bf16.mxu0 0
    %713 = vmatpush1.bf16.msra.mxu0 0
    %714 = vmatprep.subr.bf16.mxu0 0
    %715 = vmatpush1.bf16.msra.mxu0 0
    %716 = vmatprep.subr.bf16.mxu0 0
    %717 = vmatpush1.bf16.msra.mxu0 0
    %718 = vmatprep.subr.bf16.mxu0 0
    %719 = vmatpush1.bf16.msra.mxu0 0
    %720 = vmatprep.subr.bf16.mxu0 0
    %721 = vmatpush1.bf16.msra.mxu0 0
    %722 = vmatprep.subr.bf16.mxu0 0
    %723 = vmatpush1.bf16.msra.mxu0 0
    %724 = vmatprep.subr.bf16.mxu0 0
    %725 = vmatpush1.bf16.msra.mxu0 0
    %726 = vmatprep.subr.bf16.mxu0 0
    %727 = vmatpush1.bf16.msra.mxu0 0
    %728 = vmatprep.mubr.bf16.mxu0 0
    %729 = vmatmul.mubr.bf16.gmra.mrb[0].mxu0 %v630
    %v730 = vpop.f32.mrb[0].mxu0
    %v731 = vadd.f32 0.0, %v730
    %v732 = vpop.f32.mrb[0].mxu0
    %v733 = vpop.f32.mrb[0].mxu0
    %v734 = vpop.f32.mrb[0].mxu0
    %735 = vdwg.mxu0
    %v736 = vadd.f32 %v514, %v731
    %737 = vst [vmem:[#allocation9] sm:$0xff] %v736
    // Predicated region
    $region30: #{tpu_custom_call.1} parent=1 // pred_check
      _
    $region31: #{tpu_custom_call.1} parent=1 // pred_check_branch
      %739 = sbr.rel (0) target = $region33
    $region32: #{tpu_custom_call.1} parent=1 // pred_region
      %s741 = ssub.s32 128, 128
      %742 = vsyncadd [#allocation5], %s741
      %s744 = sshll.u32 [#allocation9], 4
      %s745 = int_to_ptr.vmem [resolvable:$true] %s744
      %747 = dma.vmem_to_hbm [thread:$0]  %s745, 128, %s4, [#allocation5]
    $region33: #{tpu_custom_call.1} parent=1 // pred_fallthru
      _
    // Predicated region
    $region34: #{tpu_custom_call.1} parent=1 // pred_check
      _
    $region35: #{tpu_custom_call.1} parent=1 // pred_check_branch
      %749 = sbr.rel (0) target = $region37
    $region36: #{tpu_custom_call.1} parent=1 // pred_region
      %750 = dma.done [#allocation5], 128
    $region37: #{tpu_custom_call.1} parent=1 // pred_fallthru
      _
    %751 = vsyncpa [#allocation4], 1
    %752 = vsyncpa [#allocation7], 1
    %753 = vsyncpa [#allocation5], 1

// kernel: tpu_custom_call.1
$region0: #{tpu_custom_call.1}
  #allocation0 [shape = 'u32[]', space=smem, size = 0x4, offset = 0x4, fixed_abs, tag = 'smem constant byte address 0x4 - core index']
  #allocation1 [shape = 'u32[144,128]{1,0:T(1,128)}', space=vmem, size = 0x12000, scoped, tag = 'internal scratch']
  #allocation2 [shape = 'f32[8,128]{1,0:T(8,128)}', space=vmem, size = 0x1000, scoped, tag = 'scratch operand']
  %s0 = inlined_call_operand.hbm [shape: f32[8,128], index: 0, kind: input, shape index: {}]
  %s1 = inlined_call_operand.hbm [shape: bf16[3,128,128], index: 1, kind: input, shape index: {}]
  %s2 = inlined_call_operand.vmem [shape: f32[3,1,128], index: 2, kind: input, shape index: {}]
  %s3 = inlined_call_operand.hbm [shape: bf16[3,128,128], index: 3, kind: input, shape index: {}]
  %s4 = inlined_call_operand.hbm [shape: f32[8,128], index: 4, kind: output, shape index: {}]
  %s5 = sld [smem:[#allocation0]]
  $region38: #{tpu_custom_call.1} parent=0
    _
  %s7 = ssub.s32 1, %s5
  %s8 = scalar_select 0, %s7, %s5
  $region1: #{tpu_custom_call.1} parent=0
    #allocation3 [shape = 'u8[4096]{0}', space=vmem, size = 0x1000, scoped, tag = 'input window, operand 0, single buffered']
    #allocation4 [shape = 's32[1]{0}', space=sflag, size = 0x4, scoped, tag = 'scoped memory for tpu_custom_call.1']
    #allocation5 [shape = 's32[1]{0}', space=sflag, size = 0x4, scoped, tag = 'scoped memory for tpu_custom_call.1']
    #allocation6 [shape = 'u8[98304]{0}', space=vmem, size = 0x18000, scoped, tag = 'input window, operand 1, single buffered']
    #allocation7 [shape = 's32[1]{0}', space=sflag, size = 0x4, scoped, tag = 'scoped memory for tpu_custom_call.1']
    #allocation8 [shape = 'u8[98304]{0}', space=vmem, size = 0x18000, scoped, tag = 'input window, operand 3, single buffered']
    #allocation9 [shape = 'u8[4096]{0}', space=vmem, size = 0x1000, scoped, tag = 'output window, operand 0, single buffered']
    %9 = vsyncpa [#allocation4], 0
    %10 = vsyncpa [#allocation7], 0
    %11 = vsyncpa [#allocation5], 0
    // Predicated region
    $region2: #{tpu_custom_call.1} parent=1 // pred_check
      _
    $region3: #{tpu_custom_call.1} parent=1 // pred_check_branch
      %13 = sbr.rel (0) target = $region5
    $region4: #{tpu_custom_call.1} parent=1 // pred_region
      %s15 = ssub.s32 128, 128
      %16 = vsyncadd [#allocation4], %s15
      %s18 = sshll.u32 [#allocation3], 4
      %s19 = int_to_ptr.vmem [resolvable:$true] %s18
      %21 = dma.hbm_to_vmem [thread:$0]  %s0, 128, %s19, [#allocation4]
    $region5: #{tpu_custom_call.1} parent=1 // pred_fallthru
      _
    // Predicated region
    $region6: #{tpu_custom_call.1} parent=1 // pred_check
      _
    $region7: #{tpu_custom_call.1} parent=1 // pred_check_branch
      %23 = sbr.rel (0) target = $region9
    $region8: #{tpu_custom_call.1} parent=1 // pred_region
      %s25 = ssub.s32 3072, 3072
      %26 = vsyncadd [#allocation7], %s25
      %s27 = sshll.u32 [#allocation6], 4
      %s28 = int_to_ptr.vmem [resolvable:$true] %s27
      %33 = dma.hbm_to_vmem [thread:$0]  %s1, 3072, %s28, [#allocation7], 64, 64, 4
    $region9: #{tpu_custom_call.1} parent=1 // pred_fallthru
      _
    // Predicated region
    $region10: #{tpu_custom_call.1} parent=1 // pred_check
      _
    $region11: #{tpu_custom_call.1} parent=1 // pred_check_branch
      %35 = sbr.rel (0) target = $region13
    $region12: #{tpu_custom_call.1} parent=1 // pred_region
      _
    $region13: #{tpu_custom_call.1} parent=1 // pred_fallthru
      _
    // Predicated region
    $region14: #{tpu_custom_call.1} parent=1 // pred_check
      _
    $region15: #{tpu_custom_call.1} parent=1 // pred_check_branch
      %37 = sbr.rel (0) target = $region17
    $region16: #{tpu_custom_call.1} parent=1 // pred_region
      %s39 = ssub.s32 3072, 3072
      %40 = vsyncadd [#allocation7], %s39
      %s41 = sshll.u32 [#allocation8], 4
      %s42 = int_to_ptr.vmem [resolvable:$true] %s41
      %47 = dma.hbm_to_vmem [thread:$0]  %s3, 3072, %s42, [#allocation7], 64, 64, 4
    $region17: #{tpu_custom_call.1} parent=1 // pred_fallthru
      _
    // Predicated region
    $region18: #{tpu_custom_call.1} parent=1 // pred_check
      _
    $region19: #{tpu_custom_call.1} parent=1 // pred_check_branch
      %49 = sbr.rel (0) target = $region21
    $region20: #{tpu_custom_call.1} parent=1 // pred_region
      %50 = dma.done [#allocation4], 128
    $region21: #{tpu_custom_call.1} parent=1 // pred_fallthru
      _
    // Predicated region
    $region22: #{tpu_custom_call.1} parent=1 // pred_check
      _
    $region23: #{tpu_custom_call.1} parent=1 // pred_check_branch
      %52 = sbr.rel (0) target = $region25
    $region24: #{tpu_custom_call.1} parent=1 // pred_region
      %53 = dma.done [#allocation7], 3072
    $region25: #{tpu_custom_call.1} parent=1 // pred_fallthru
      _
    // Predicated region
    $region26: #{tpu_custom_call.1} parent=1 // pred_check
      _
    $region27: #{tpu_custom_call.1} parent=1 // pred_check_branch
      %55 = sbr.rel (0) target = $region29
    $region28: #{tpu_custom_call.1} parent=1 // pred_region
      %56 = dma.done [#allocation7], 3072
    $region29: #{tpu_custom_call.1} parent=1 // pred_fallthru
      _
    %v58 = vld [vmem:[#allocation3] sm:$0xff]
    %v59 = vlaneseq
    %v60 = vand.u32 %v59, 127
    %vm61 = vcmp.lt.s32.totalorder %v60, 64
    %62 = vrot.lane.b32.xlu0 %v58, 64
    %v63 = vpop.permute.xlu0 %62
    %v64 = vadd.f32 %v58, %v63
    %65 = vrot.lane.b32.xlu0 %v64, 64
    %v66 = vpop.permute.xlu0 %65
    %v67 = vsel %vm61, %v64, %v66
    %v68 = vpack.c.bf16 %v64, %v64
    %v69 = vld [vmem:[#allocation6] sm:$0xf]
    %v70 = vld [vmem:[#allocation6 + $0x4] sm:$0xf]
    %v71 = vld [vmem:[#allocation6 + $0x8] sm:$0xf]
    %v72 = vld [vmem:[#allocation6 + $0xc] sm:$0xf]
    %v73 = vld [vmem:[#allocation6 + $0x10] sm:$0xf]
    %v74 = vld [vmem:[#allocation6 + $0x14] sm:$0xf]
    %v75 = vld [vmem:[#allocation6 + $0x18] sm:$0xf]
    %v76 = vld [vmem:[#allocation6 + $0x1c] sm:$0xf]
    %v77 = vld [vmem:[#allocation6 + $0x20] sm:$0xf]
    %v78 = vld [vmem:[#allocation6 + $0x24] sm:$0xf]
    %v79 = vld [vmem:[#allocation6 + $0x28] sm:$0xf]
    %v80 = vld [vmem:[#allocation6 + $0x2c] sm:$0xf]
    %v81 = vld [vmem:[#allocation6 + $0x30] sm:$0xf]
    %v82 = vld [vmem:[#allocation6 + $0x34] sm:$0xf]
    %v83 = vld [vmem:[#allocation6 + $0x38] sm:$0xf]
    %v84 = vld [vmem:[#allocation6 + $0x3c] sm:$0xf]
    %v85 = vld [vmem:[%s2] sm:$0x1]
    %v87 = vlaneseq
    %v88 = vshrl.u32 %v87, 7
    %v89 = vsub.s32 0, %v88
    %v90 = vrot.slane %v85, %v89
    %v108 = vunpack.c.l.b16 %v69
    %v109 = vunpack.c.l.b16 %v70
    %v110 = vunpack.c.l.b16 %v71
    %v111 = vunpack.c.l.b16 %v72
    %v112 = vunpack.c.l.b16 %v73
    %v113 = vunpack.c.l.b16 %v74
    %v114 = vunpack.c.l.b16 %v75
    %v115 = vunpack.c.l.b16 %v76
    %v116 = vunpack.c.l.b16 %v77
    %v117 = vunpack.c.l.b16 %v78
    %v118 = vunpack.c.l.b16 %v79
    %v119 = vunpack.c.l.b16 %v80
    %v120 = vunpack.c.l.b16 %v81
    %v121 = vunpack.c.l.b16 %v82
    %v122 = vunpack.c.l.b16 %v83
    %v123 = vunpack.c.l.b16 %v84
    %v124 = vpack.c.b16 %v109, %v108
    %v125 = vpack.c.b16 %v111, %v110
    %v126 = vpack.c.b16 %v113, %v112
    %v127 = vpack.c.b16 %v115, %v114
    %v128 = vpack.c.b16 %v117, %v116
    %v129 = vpack.c.b16 %v119, %v118
    %v130 = vpack.c.b16 %v121, %v120
    %v131 = vpack.c.b16 %v123, %v122
    %140 = vmatprep.subr.bf16.mxu0 0
    %141 = vmatpush1.bf16.msra.mxu0 %v124
    %142 = vmatprep.subr.bf16.mxu0 0
    %143 = vmatpush1.bf16.msra.mxu0 %v125
    %144 = vmatprep.subr.bf16.mxu0 0
    %145 = vmatpush1.bf16.msra.mxu0 %v126
    %146 = vmatprep.subr.bf16.mxu0 0
    %147 = vmatpush1.bf16.msra.mxu0 %v127
    %148 = vmatprep.subr.bf16.mxu0 0
    %149 = vmatpush1.bf16.msra.mxu0 %v128
    %150 = vmatprep.subr.bf16.mxu0 0
    %151 = vmatpush1.bf16.msra.mxu0 %v129
    %152 = vmatprep.subr.bf16.mxu0 0
    %153 = vmatpush1.bf16.msra.mxu0 %v130
    %154 = vmatprep.subr.bf16.mxu0 0
    %155 = vmatpush1.bf16.msra.mxu0 %v131
    %156 = vmatprep.subr.bf16.mxu0 0
    %157 = vmatpush1.bf16.msra.mxu0 0
    %158 = vmatprep.subr.bf16.mxu0 0
    %159 = vmatpush1.bf16.msra.mxu0 0
    %160 = vmatprep.subr.bf16.mxu0 0
    %161 = vmatpush1.bf16.msra.mxu0 0
    %162 = vmatprep.subr.bf16.mxu0 0
    %163 = vmatpush1.bf16.msra.mxu0 0
    %164 = vmatprep.subr.bf16.mxu0 0
    %165 = vmatpush1.bf16.msra.mxu0 0
    %166 = vmatprep.subr.bf16.mxu0 0
    %167 = vmatpush1.bf16.msra.mxu0 0
    %168 = vmatprep.subr.bf16.mxu0 0
    %169 = vmatpush1.bf16.msra.mxu0 0
    %170 = vmatprep.subr.bf16.mxu0 0
    %171 = vmatpush1.bf16.msra.mxu0 0
    %172 = vmatprep.mubr.bf16.mxu0 0
    %173 = vmatmul.mubr.bf16.gmra.mrb[0].mxu0 %v68
    %v174 = vpop.f32.mrb[0].mxu0
    %v175 = vadd.f32 %v90, %v174
    %v176 = vpop.f32.mrb[0].mxu0
    %v177 = vpop.f32.mrb[0].mxu0
    %v178 = vpop.f32.mrb[0].mxu0
    %179 = vdwg.mxu0
    %v180 = vtanh.pop %v175
    %v181 = vpack.c.bf16 %v180, %v180
    %v182 = vld [vmem:[#allocation8] sm:$0xf]
    %v183 = vld [vmem:[#allocation8 + $0x4] sm:$0xf]
    %v184 = vld [vmem:[#allocation8 + $0x8] sm:$0xf]
    %v185 = vld [vmem:[#allocation8 + $0xc] sm:$0xf]
    %v186 = vld [vmem:[#allocation8 + $0x10] sm:$0xf]
    %v187 = vld [vmem:[#allocation8 + $0x14] sm:$0xf]
    %v188 = vld [vmem:[#allocation8 + $0x18] sm:$0xf]
    %v189 = vld [vmem:[#allocation8 + $0x1c] sm:$0xf]
    %v190 = vld [vmem:[#allocation8 + $0x20] sm:$0xf]
    %v191 = vld [vmem:[#allocation8 + $0x24] sm:$0xf]
    %v192 = vld [vmem:[#allocation8 + $0x28] sm:$0xf]
    %v193 = vld [vmem:[#allocation8 + $0x2c] sm:$0xf]
    %v194 = vld [vmem:[#allocation8 + $0x30] sm:$0xf]
    %v195 = vld [vmem:[#allocation8 + $0x34] sm:$0xf]
    %v196 = vld [vmem:[#allocation8 + $0x38] sm:$0xf]
    %v197 = vld [vmem:[#allocation8 + $0x3c] sm:$0xf]
    %v214 = vunpack.c.l.b16 %v182
    %v215 = vunpack.c.l.b16 %v183
    %v216 = vunpack.c.l.b16 %v184
    %v217 = vunpack.c.l.b16 %v185
    %v218 = vunpack.c.l.b16 %v186
    %v219 = vunpack.c.l.b16 %v187
    %v220 = vunpack.c.l.b16 %v188
    %v221 = vunpack.c.l.b16 %v189
    %v222 = vunpack.c.l.b16 %v190
    %v223 = vunpack.c.l.b16 %v191
    %v224 = vunpack.c.l.b16 %v192
    %v225 = vunpack.c.l.b16 %v193
    %v226 = vunpack.c.l.b16 %v194
    %v227 = vunpack.c.l.b16 %v195
    %v228 = vunpack.c.l.b16 %v196
    %v229 = vunpack.c.l.b16 %v197
    %v230 = vpack.c.b16 %v215, %v214
    %v231 = vpack.c.b16 %v217, %v216
    %v232 = vpack.c.b16 %v219, %v218
    %v233 = vpack.c.b16 %v221, %v220
    %v234 = vpack.c.b16 %v223, %v222
    %v235 = vpack.c.b16 %v225, %v224
    %v236 = vpack.c.b16 %v227, %v226
    %v237 = vpack.c.b16 %v229, %v228
    %246 = vmatprep.subr.bf16.mxu0 0
    %247 = vmatpush1.bf16.msra.mxu0 %v230
    %248 = vmatprep.subr.bf16.mxu0 0
    %249 = vmatpush1.bf16.msra.mxu0 %v231
    %250 = vmatprep.subr.bf16.mxu0 0
    %251 = vmatpush1.bf16.msra.mxu0 %v232
    %252 = vmatprep.subr.bf16.mxu0 0
    %253 = vmatpush1.bf16.msra.mxu0 %v233
    %254 = vmatprep.subr.bf16.mxu0 0
    %255 = vmatpush1.bf16.msra.mxu0 %v234
    %256 = vmatprep.subr.bf16.mxu0 0
    %257 = vmatpush1.bf16.msra.mxu0 %v235
    %258 = vmatprep.subr.bf16.mxu0 0
    %259 = vmatpush1.bf16.msra.mxu0 %v236
    %260 = vmatprep.subr.bf16.mxu0 0
    %261 = vmatpush1.bf16.msra.mxu0 %v237
    %262 = vmatprep.subr.bf16.mxu0 0
    %263 = vmatpush1.bf16.msra.mxu0 0
    %264 = vmatprep.subr.bf16.mxu0 0
    %265 = vmatpush1.bf16.msra.mxu0 0
    %266 = vmatprep.subr.bf16.mxu0 0
    %267 = vmatpush1.bf16.msra.mxu0 0
    %268 = vmatprep.subr.bf16.mxu0 0
    %269 = vmatpush1.bf16.msra.mxu0 0
    %270 = vmatprep.subr.bf16.mxu0 0
    %271 = vmatpush1.bf16.msra.mxu0 0
    %272 = vmatprep.subr.bf16.mxu0 0
    %273 = vmatpush1.bf16.msra.mxu0 0
    %274 = vmatprep.subr.bf16.mxu0 0
    %275 = vmatpush1.bf16.msra.mxu0 0
    %276 = vmatprep.subr.bf16.mxu0 0
    %277 = vmatpush1.bf16.msra.mxu0 0
    %278 = vmatprep.mubr.bf16.mxu0 0
    %279 = vmatmul.mubr.bf16.gmra.mrb[0].mxu0 %v181
    %v280 = vpop.f32.mrb[0].mxu0
    %v281 = vadd.f32 0.0, %v280
    %v282 = vpop.f32.mrb[0].mxu0
    %v283 = vpop.f32.mrb[0].mxu0
    %v284 = vpop.f32.mrb[0].mxu0
    %285 = vdwg.mxu0
    %v286 = vadd.f32 %v67, %v281
    %287 = vrot.lane.b32.xlu0 %v286, 64
    %v288 = vpop.permute.xlu0 %287
    %v289 = vsel %vm61, %v286, %v288
    %v290 = vpack.c.bf16 %v286, %v286
    %s291 = scalar_lea.vmem [#allocation6], 64
    %v292 = vld [vmem:[%s291] sm:$0xf]
    %v293 = vld [vmem:[%s291 + $0x4] sm:$0xf]
    %v294 = vld [vmem:[%s291 + $0x8] sm:$0xf]
    %v295 = vld [vmem:[%s291 + $0xc] sm:$0xf]
    %v296 = vld [vmem:[%s291 + $0x10] sm:$0xf]
    %v297 = vld [vmem:[%s291 + $0x14] sm:$0xf]
    %v298 = vld [vmem:[%s291 + $0x18] sm:$0xf]
    %v299 = vld [vmem:[%s291 + $0x1c] sm:$0xf]
    %v300 = vld [vmem:[%s291 + $0x20] sm:$0xf]
    %v301 = vld [vmem:[%s291 + $0x24] sm:$0xf]
    %v302 = vld [vmem:[%s291 + $0x28] sm:$0xf]
    %v303 = vld [vmem:[%s291 + $0x2c] sm:$0xf]
    %v304 = vld [vmem:[%s291 + $0x30] sm:$0xf]
    %v305 = vld [vmem:[%s291 + $0x34] sm:$0xf]
    %v306 = vld [vmem:[%s291 + $0x38] sm:$0xf]
    %v307 = vld [vmem:[%s291 + $0x3c] sm:$0xf]
    %s308 = scalar_lea.vmem %s2, 1
    %v309 = vld [vmem:[%s308] sm:$0x1]
    %v311 = vlaneseq
    %v312 = vshrl.u32 %v311, 7
    %v313 = vsub.s32 0, %v312
    %v314 = vrot.slane %v309, %v313
    %v332 = vunpack.c.l.b16 %v292
    %v333 = vunpack.c.l.b16 %v293
    %v334 = vunpack.c.l.b16 %v294
    %v335 = vunpack.c.l.b16 %v295
    %v336 = vunpack.c.l.b16 %v296
    %v337 = vunpack.c.l.b16 %v297
    %v338 = vunpack.c.l.b16 %v298
    %v339 = vunpack.c.l.b16 %v299
    %v340 = vunpack.c.l.b16 %v300
    %v341 = vunpack.c.l.b16 %v301
    %v342 = vunpack.c.l.b16 %v302
    %v343 = vunpack.c.l.b16 %v303
    %v344 = vunpack.c.l.b16 %v304
    %v345 = vunpack.c.l.b16 %v305
    %v346 = vunpack.c.l.b16 %v306
    %v347 = vunpack.c.l.b16 %v307
    %v348 = vpack.c.b16 %v333, %v332
    %v349 = vpack.c.b16 %v335, %v334
    %v350 = vpack.c.b16 %v337, %v336
    %v351 = vpack.c.b16 %v339, %v338
    %v352 = vpack.c.b16 %v341, %v340
    %v353 = vpack.c.b16 %v343, %v342
    %v354 = vpack.c.b16 %v345, %v344
    %v355 = vpack.c.b16 %v347, %v346
    %364 = vmatprep.subr.bf16.mxu0 0
    %365 = vmatpush1.bf16.msra.mxu0 %v348
    %366 = vmatprep.subr.bf16.mxu0 0
    %367 = vmatpush1.bf16.msra.mxu0 %v349
    %368 = vmatprep.subr.bf16.mxu0 0
    %369 = vmatpush1.bf16.msra.mxu0 %v350
    %370 = vmatprep.subr.bf16.mxu0 0
    %371 = vmatpush1.bf16.msra.mxu0 %v351
    %372 = vmatprep.subr.bf16.mxu0 0
    %373 = vmatpush1.bf16.msra.mxu0 %v352
    %374 = vmatprep.subr.bf16.mxu0 0
    %375 = vmatpush1.bf16.msra.mxu0 %v353
    %376 = vmatprep.subr.bf16.mxu0 0
    %377 = vmatpush1.bf16.msra.mxu0 %v354
    %378 = vmatprep.subr.bf16.mxu0 0
    %379 = vmatpush1.bf16.msra.mxu0 %v355
    %380 = vmatprep.subr.bf16.mxu0 0
    %381 = vmatpush1.bf16.msra.mxu0 0
    %382 = vmatprep.subr.bf16.mxu0 0
    %383 = vmatpush1.bf16.msra.mxu0 0
    %384 = vmatprep.subr.bf16.mxu0 0
    %385 = vmatpush1.bf16.msra.mxu0 0
    %386 = vmatprep.subr.bf16.mxu0 0
    %387 = vmatpush1.bf16.msra.mxu0 0
    %388 = vmatprep.subr.bf16.mxu0 0
    %389 = vmatpush1.bf16.msra.mxu0 0
    %390 = vmatprep.subr.bf16.mxu0 0
    %391 = vmatpush1.bf16.msra.mxu0 0
    %392 = vmatprep.subr.bf16.mxu0 0
    %393 = vmatpush1.bf16.msra.mxu0 0
    %394 = vmatprep.subr.bf16.mxu0 0
    %395 = vmatpush1.bf16.msra.mxu0 0
    %396 = vmatprep.mubr.bf16.mxu0 0
    %397 = vmatmul.mubr.bf16.gmra.mrb[0].mxu0 %v290
    %v398 = vpop.f32.mrb[0].mxu0
    %v399 = vadd.f32 %v314, %v398
    %v400 = vpop.f32.mrb[0].mxu0
    %v401 = vpop.f32.mrb[0].mxu0
    %v402 = vpop.f32.mrb[0].mxu0
    %403 = vdwg.mxu0
    %v404 = vtanh.pop %v399
    %v405 = vpack.c.bf16 %v404, %v404
    %s406 = scalar_lea.vmem [#allocation8], 64
    %v407 = vld [vmem:[%s406] sm:$0xf]
    %v408 = vld [vmem:[%s406 + $0x4] sm:$0xf]
    %v409 = vld [vmem:[%s406 + $0x8] sm:$0xf]
    %v410 = vld [vmem:[%s406 + $0xc] sm:$0xf]
    %v411 = vld [vmem:[%s406 + $0x10] sm:$0xf]
    %v412 = vld [vmem:[%s406 + $0x14] sm:$0xf]
    %v413 = vld [vmem:[%s406 + $0x18] sm:$0xf]
    %v414 = vld [vmem:[%s406 + $0x1c] sm:$0xf]
    %v415 = vld [vmem:[%s406 + $0x20] sm:$0xf]
    %v416 = vld [vmem:[%s406 + $0x24] sm:$0xf]
    %v417 = vld [vmem:[%s406 + $0x28] sm:$0xf]
    %v418 = vld [vmem:[%s406 + $0x2c] sm:$0xf]
    %v419 = vld [vmem:[%s406 + $0x30] sm:$0xf]
    %v420 = vld [vmem:[%s406 + $0x34] sm:$0xf]
    %v421 = vld [vmem:[%s406 + $0x38] sm:$0xf]
    %v422 = vld [vmem:[%s406 + $0x3c] sm:$0xf]
    %v439 = vunpack.c.l.b16 %v407
    %v440 = vunpack.c.l.b16 %v408
    %v441 = vunpack.c.l.b16 %v409
    %v442 = vunpack.c.l.b16 %v410
    %v443 = vunpack.c.l.b16 %v411
    %v444 = vunpack.c.l.b16 %v412
    %v445 = vunpack.c.l.b16 %v413
    %v446 = vunpack.c.l.b16 %v414
    %v447 = vunpack.c.l.b16 %v415
    %v448 = vunpack.c.l.b16 %v416
    %v449 = vunpack.c.l.b16 %v417
    %v450 = vunpack.c.l.b16 %v418
    %v451 = vunpack.c.l.b16 %v419
    %v452 = vunpack.c.l.b16 %v420
    %v453 = vunpack.c.l.b16 %v421
    %v454 = vunpack.c.l.b16 %v422
    %v455 = vpack.c.b16 %v440, %v439
    %v456 = vpack.c.b16 %v442, %v441
    %v457 = vpack.c.b16 %v444, %v443
    %v458 = vpack.c.b16 %v446, %v445
    %v459 = vpack.c.b16 %v448, %v447
    %v460 = vpack.c.b16 %v450, %v449
    %v461 = vpack.c.b16 %v452, %v451
    %v462 = vpack.c.b16 %v454, %v453
    %471 = vmatprep.subr.bf16.mxu0 0
    %472 = vmatpush1.bf16.msra.mxu0 %v455
    %473 = vmatprep.subr.bf16.mxu0 0
    %474 = vmatpush1.bf16.msra.mxu0 %v456
    %475 = vmatprep.subr.bf16.mxu0 0
    %476 = vmatpush1.bf16.msra.mxu0 %v457
    %477 = vmatprep.subr.bf16.mxu0 0
    %478 = vmatpush1.bf16.msra.mxu0 %v458
    %479 = vmatprep.subr.bf16.mxu0 0
    %480 = vmatpush1.bf16.msra.mxu0 %v459
    %481 = vmatprep.subr.bf16.mxu0 0
    %482 = vmatpush1.bf16.msra.mxu0 %v460
    %483 = vmatprep.subr.bf16.mxu0 0
    %484 = vmatpush1.bf16.msra.mxu0 %v461
    %485 = vmatprep.subr.bf16.mxu0 0
    %486 = vmatpush1.bf16.msra.mxu0 %v462
    %487 = vmatprep.subr.bf16.mxu0 0
    %488 = vmatpush1.bf16.msra.mxu0 0
    %489 = vmatprep.subr.bf16.mxu0 0
    %490 = vmatpush1.bf16.msra.mxu0 0
    %491 = vmatprep.subr.bf16.mxu0 0
    %492 = vmatpush1.bf16.msra.mxu0 0
    %493 = vmatprep.subr.bf16.mxu0 0
    %494 = vmatpush1.bf16.msra.mxu0 0
    %495 = vmatprep.subr.bf16.mxu0 0
    %496 = vmatpush1.bf16.msra.mxu0 0
    %497 = vmatprep.subr.bf16.mxu0 0
    %498 = vmatpush1.bf16.msra.mxu0 0
    %499 = vmatprep.subr.bf16.mxu0 0
    %500 = vmatpush1.bf16.msra.mxu0 0
    %501 = vmatprep.subr.bf16.mxu0 0
    %502 = vmatpush1.bf16.msra.mxu0 0
    %503 = vmatprep.mubr.bf16.mxu0 0
    %504 = vmatmul.mubr.bf16.gmra.mrb[0].mxu0 %v405
    %v505 = vpop.f32.mrb[0].mxu0
    %v506 = vadd.f32 0.0, %v505
    %v507 = vpop.f32.mrb[0].mxu0
    %v508 = vpop.f32.mrb[0].mxu0
    %v509 = vpop.f32.mrb[0].mxu0
    %510 = vdwg.mxu0
    %v511 = vadd.f32 %v289, %v506
    %512 = vrot.lane.b32.xlu0 %v511, 64
    %v513 = vpop.permute.xlu0 %512
    %v514 = vsel %vm61, %v511, %v513
    %v515 = vpack.c.bf16 %v511, %v511
    %s516 = scalar_lea.vmem [#allocation6], 128
    %v517 = vld [vmem:[%s516] sm:$0xf]
    %v518 = vld [vmem:[%s516 + $0x4] sm:$0xf]
    %v519 = vld [vmem:[%s516 + $0x8] sm:$0xf]
    %v520 = vld [vmem:[%s516 + $0xc] sm:$0xf]
    %v521 = vld [vmem:[%s516 + $0x10] sm:$0xf]
    %v522 = vld [vmem:[%s516 + $0x14] sm:$0xf]
    %v523 = vld [vmem:[%s516 + $0x18] sm:$0xf]
    %v524 = vld [vmem:[%s516 + $0x1c] sm:$0xf]
    %v525 = vld [vmem:[%s516 + $0x20] sm:$0xf]
    %v526 = vld [vmem:[%s516 + $0x24] sm:$0xf]
    %v527 = vld [vmem:[%s516 + $0x28] sm:$0xf]
    %v528 = vld [vmem:[%s516 + $0x2c] sm:$0xf]
    %v529 = vld [vmem:[%s516 + $0x30] sm:$0xf]
    %v530 = vld [vmem:[%s516 + $0x34] sm:$0xf]
    %v531 = vld [vmem:[%s516 + $0x38] sm:$0xf]
    %v532 = vld [vmem:[%s516 + $0x3c] sm:$0xf]
    %s533 = scalar_lea.vmem %s2, 2
    %v534 = vld [vmem:[%s533] sm:$0x1]
    %v536 = vlaneseq
    %v537 = vshrl.u32 %v536, 7
    %v538 = vsub.s32 0, %v537
    %v539 = vrot.slane %v534, %v538
    %v557 = vunpack.c.l.b16 %v517
    %v558 = vunpack.c.l.b16 %v518
    %v559 = vunpack.c.l.b16 %v519
    %v560 = vunpack.c.l.b16 %v520
    %v561 = vunpack.c.l.b16 %v521
    %v562 = vunpack.c.l.b16 %v522
    %v563 = vunpack.c.l.b16 %v523
    %v564 = vunpack.c.l.b16 %v524
    %v565 = vunpack.c.l.b16 %v525
    %v566 = vunpack.c.l.b16 %v526
    %v567 = vunpack.c.l.b16 %v527
    %v568 = vunpack.c.l.b16 %v528
    %v569 = vunpack.c.l.b16 %v529
    %v570 = vunpack.c.l.b16 %v530
    %v571 = vunpack.c.l.b16 %v531
    %v572 = vunpack.c.l.b16 %v532
    %v573 = vpack.c.b16 %v558, %v557
    %v574 = vpack.c.b16 %v560, %v559
    %v575 = vpack.c.b16 %v562, %v561
    %v576 = vpack.c.b16 %v564, %v563
    %v577 = vpack.c.b16 %v566, %v565
    %v578 = vpack.c.b16 %v568, %v567
    %v579 = vpack.c.b16 %v570, %v569
    %v580 = vpack.c.b16 %v572, %v571
    %589 = vmatprep.subr.bf16.mxu0 0
    %590 = vmatpush1.bf16.msra.mxu0 %v573
    %591 = vmatprep.subr.bf16.mxu0 0
    %592 = vmatpush1.bf16.msra.mxu0 %v574
    %593 = vmatprep.subr.bf16.mxu0 0
    %594 = vmatpush1.bf16.msra.mxu0 %v575
    %595 = vmatprep.subr.bf16.mxu0 0
    %596 = vmatpush1.bf16.msra.mxu0 %v576
    %597 = vmatprep.subr.bf16.mxu0 0
    %598 = vmatpush1.bf16.msra.mxu0 %v577
    %599 = vmatprep.subr.bf16.mxu0 0
    %600 = vmatpush1.bf16.msra.mxu0 %v578
    %601 = vmatprep.subr.bf16.mxu0 0
    %602 = vmatpush1.bf16.msra.mxu0 %v579
    %603 = vmatprep.subr.bf16.mxu0 0
    %604 = vmatpush1.bf16.msra.mxu0 %v580
    %605 = vmatprep.subr.bf16.mxu0 0
    %606 = vmatpush1.bf16.msra.mxu0 0
    %607 = vmatprep.subr.bf16.mxu0 0
    %608 = vmatpush1.bf16.msra.mxu0 0
    %609 = vmatprep.subr.bf16.mxu0 0
    %610 = vmatpush1.bf16.msra.mxu0 0
    %611 = vmatprep.subr.bf16.mxu0 0
    %612 = vmatpush1.bf16.msra.mxu0 0
    %613 = vmatprep.subr.bf16.mxu0 0
    %614 = vmatpush1.bf16.msra.mxu0 0
    %615 = vmatprep.subr.bf16.mxu0 0
    %616 = vmatpush1.bf16.msra.mxu0 0
    %617 = vmatprep.subr.bf16.mxu0 0
    %618 = vmatpush1.bf16.msra.mxu0 0
    %619 = vmatprep.subr.bf16.mxu0 0
    %620 = vmatpush1.bf16.msra.mxu0 0
    %621 = vmatprep.mubr.bf16.mxu0 0
    %622 = vmatmul.mubr.bf16.gmra.mrb[0].mxu0 %v515
    %v623 = vpop.f32.mrb[0].mxu0
    %v624 = vadd.f32 %v539, %v623
    %v625 = vpop.f32.mrb[0].mxu0
    %v626 = vpop.f32.mrb[0].mxu0
    %v627 = vpop.f32.mrb[0].mxu0
    %628 = vdwg.mxu0
    %v629 = vtanh.pop %v624
    %v630 = vpack.c.bf16 %v629, %v629
    %s631 = scalar_lea.vmem [#allocation8], 128
    %v632 = vld [vmem:[%s631] sm:$0xf]
    %v633 = vld [vmem:[%s631 + $0x4] sm:$0xf]
    %v634 = vld [vmem:[%s631 + $0x8] sm:$0xf]
    %v635 = vld [vmem:[%s631 + $0xc] sm:$0xf]
    %v636 = vld [vmem:[%s631 + $0x10] sm:$0xf]
    %v637 = vld [vmem:[%s631 + $0x14] sm:$0xf]
    %v638 = vld [vmem:[%s631 + $0x18] sm:$0xf]
    %v639 = vld [vmem:[%s631 + $0x1c] sm:$0xf]
    %v640 = vld [vmem:[%s631 + $0x20] sm:$0xf]
    %v641 = vld [vmem:[%s631 + $0x24] sm:$0xf]
    %v642 = vld [vmem:[%s631 + $0x28] sm:$0xf]
    %v643 = vld [vmem:[%s631 + $0x2c] sm:$0xf]
    %v644 = vld [vmem:[%s631 + $0x30] sm:$0xf]
    %v645 = vld [vmem:[%s631 + $0x34] sm:$0xf]
    %v646 = vld [vmem:[%s631 + $0x38] sm:$0xf]
    %v647 = vld [vmem:[%s631 + $0x3c] sm:$0xf]
    %v664 = vunpack.c.l.b16 %v632
    %v665 = vunpack.c.l.b16 %v633
    %v666 = vunpack.c.l.b16 %v634
    %v667 = vunpack.c.l.b16 %v635
    %v668 = vunpack.c.l.b16 %v636
    %v669 = vunpack.c.l.b16 %v637
    %v670 = vunpack.c.l.b16 %v638
    %v671 = vunpack.c.l.b16 %v639
    %v672 = vunpack.c.l.b16 %v640
    %v673 = vunpack.c.l.b16 %v641
    %v674 = vunpack.c.l.b16 %v642
    %v675 = vunpack.c.l.b16 %v643
    %v676 = vunpack.c.l.b16 %v644
    %v677 = vunpack.c.l.b16 %v645
    %v678 = vunpack.c.l.b16 %v646
    %v679 = vunpack.c.l.b16 %v647
    %v680 = vpack.c.b16 %v665, %v664
    %v681 = vpack.c.b16 %v667, %v666
    %v682 = vpack.c.b16 %v669, %v668
    %v683 = vpack.c.b16 %v671, %v670
    %v684 = vpack.c.b16 %v673, %v672
    %v685 = vpack.c.b16 %v675, %v674
    %v686 = vpack.c.b16 %v677, %v676
    %v687 = vpack.c.b16 %v679, %v678
    %696 = vmatprep.subr.bf16.mxu0 0
    %697 = vmatpush1.bf16.msra.mxu0 %v680
    %698 = vmatprep.subr.bf16.mxu0 0
    %699 = vmatpush1.bf16.msra.mxu0 %v681
    %700 = vmatprep.subr.bf16.mxu0 0
    %701 = vmatpush1.bf16.msra.mxu0 %v682
    %702 = vmatprep.subr.bf16.mxu0 0
    %703 = vmatpush1.bf16.msra.mxu0 %v683
    %704 = vmatprep.subr.bf16.mxu0 0
    %705 = vmatpush1.bf16.msra.mxu0 %v684
    %706 = vmatprep.subr.bf16.mxu0 0
    %707 = vmatpush1.bf16.msra.mxu0 %v685
    %708 = vmatprep.subr.bf16.mxu0 0
    %709 = vmatpush1.bf16.msra.mxu0 %v686
    %710 = vmatprep.subr.bf16.mxu0 0
    %711 = vmatpush1.bf16.msra.mxu0 %v687
    %712 = vmatprep.subr.bf16.mxu0 0
    %713 = vmatpush1.bf16.msra.mxu0 0
    %714 = vmatprep.subr.bf16.mxu0 0
    %715 = vmatpush1.bf16.msra.mxu0 0
    %716 = vmatprep.subr.bf16.mxu0 0
    %717 = vmatpush1.bf16.msra.mxu0 0
    %718 = vmatprep.subr.bf16.mxu0 0
    %719 = vmatpush1.bf16.msra.mxu0 0
    %720 = vmatprep.subr.bf16.mxu0 0
    %721 = vmatpush1.bf16.msra.mxu0 0
    %722 = vmatprep.subr.bf16.mxu0 0
    %723 = vmatpush1.bf16.msra.mxu0 0
    %724 = vmatprep.subr.bf16.mxu0 0
    %725 = vmatpush1.bf16.msra.mxu0 0
    %726 = vmatprep.subr.bf16.mxu0 0
    %727 = vmatpush1.bf16.msra.mxu0 0
    %728 = vmatprep.mubr.bf16.mxu0 0
    %729 = vmatmul.mubr.bf16.gmra.mrb[0].mxu0 %v630
    %v730 = vpop.f32.mrb[0].mxu0
    %v731 = vadd.f32 0.0, %v730
    %v732 = vpop.f32.mrb[0].mxu0
    %v733 = vpop.f32.mrb[0].mxu0
    %v734 = vpop.f32.mrb[0].mxu0
    %735 = vdwg.mxu0
    %v736 = vadd.f32 %v514, %v731
    %737 = vst [vmem:[#allocation9] sm:$0xff] %v736
    // Predicated region
    $region30: #{tpu_custom_call.1} parent=1 // pred_check
      _
    $region31: #{tpu_custom_call.1} parent=1 // pred_check_branch
      %739 = sbr.rel (0) target = $region33
    $region32: #{tpu_custom_call.1} parent=1 // pred_region
      %s741 = ssub.s32 128, 128
      %742 = vsyncadd [#allocation5], %s741
      %s744 = sshll.u32 [#allocation9], 4
      %s745 = int_to_ptr.vmem [resolvable:$true] %s744
      %747 = dma.vmem_to_hbm [thread:$0]  %s745, 128, %s4, [#allocation5]
    $region33: #{tpu_custom_call.1} parent=1 // pred_fallthru
      _
    // Predicated region
    $region34: #{tpu_custom_call.1} parent=1 // pred_check
      _
    $region35: #{tpu_custom_call.1} parent=1 // pred_check_branch
      %749 = sbr.rel (0) target = $region37
    $region36: #{tpu_custom_call.1} parent=1 // pred_region
      %750 = dma.done [#allocation5], 128
    $region37: #{tpu_custom_call.1} parent=1 // pred_fallthru
      _
    %751 = vsyncpa [#allocation4], 1
    %752 = vsyncpa [#allocation7], 1
    %753 = vsyncpa [#allocation5], 1

</llo_original>
